<compile_context>
chip_gen: v7x
topology: tpu7x:2x2x1
jax: 0.10.0
libtpu: 0.0.40
codegen_flags: <defaults>
</compile_context>

<pallas_src>
import functools
import math

import jax
import jax.numpy as jnp
from jax import lax
from jax.experimental import pallas as pl
from jax.experimental.pallas import tpu as pltpu


# ----------------------------- fused Pallas kernel ---------------------------


def _fused_attention_kernel(q_ref, k_ref, v_ref,
                            wq_ref, wk_ref, wv_ref, wo_ref,
                            bq_ref, bk_ref, bv_ref, bo_ref,
                            o_ref, *, num_heads, matmul_dtype, approx_recip):
    """Full FullPatchAttention forward for one (batch, query-tile) grid step.

    q block: (1, TQ, D); k/v blocks: (1, N, D); wq/wk/wv: (H, D, Dh);
    wo: (H*Dh, D); bq/bk/bv: (H, 1, Dh); bo: (1, D); out block: (1, TQ, D).
    Weights/biases stay VMEM-resident (constant index_map, single buffer).
    """
    f32 = jnp.float32

    x_q = q_ref[0].astype(matmul_dtype)          # (TQ, D)
    x_k = k_ref[0].astype(matmul_dtype)          # (N,  D)
    x_v = v_ref[0].astype(matmul_dtype)          # (N,  D)

    head_outs = []
    # Static unrolled loop over heads (small H); leading-axis weight indexing
    # only — no lane slicing anywhere.
    for h in range(num_heads):
        wq_h = wq_ref[h].astype(matmul_dtype)    # (D, Dh) — scale pre-folded
        wk_h = wk_ref[h].astype(matmul_dtype)
        wv_h = wv_ref[h].astype(matmul_dtype)

        qh = (jnp.dot(x_q, wq_h, preferred_element_type=f32)
              + bq_ref[h]).astype(matmul_dtype)                  # (TQ, Dh)
        kh = (jnp.dot(x_k, wk_h, preferred_element_type=f32)
              + bk_ref[h]).astype(matmul_dtype)                  # (N, Dh)
        vh = (jnp.dot(x_v, wv_h, preferred_element_type=f32)
              + bv_ref[h]).astype(matmul_dtype)                  # (N, Dh)

        # Scores: contract last dims directly (no materialized k.T).
        s = lax.dot_general(qh, kh, (((1,), (1,)), ((), ())),
                            preferred_element_type=f32)          # (TQ, N) f32
        m = jnp.max(s, axis=-1, keepdims=True)
        p = jnp.exp(s - m)                                       # f32
        l = jnp.sum(p, axis=-1, keepdims=True)

        # Deferred normalization: PV matmul first, then one scale per output
        # element (EUP approximate reciprocal frees the VALU slot).
        o_un = jnp.dot(p.astype(matmul_dtype), vh,
                       preferred_element_type=f32)               # (TQ, Dh) f32
        inv_l = pl.reciprocal(l, approx=True) if approx_recip else 1.0 / l
        head_outs.append(o_un * inv_l)

    # Single fused output projection: one matmul contracting K = H*Dh.
    # The concatenated buffer only ever lives in VMEM.
    o_all = jnp.concatenate(head_outs, axis=-1).astype(matmul_dtype)  # (TQ, H*Dh)
    out = (jnp.dot(o_all, wo_ref[...].astype(matmul_dtype),
                   preferred_element_type=f32)
           + bo_ref[...])                                             # (TQ, D) f32
    o_ref[0] = out.astype(o_ref.dtype)


# ------------------------------ parameter prep --------------------------------


def prepare_params(params, num_heads, d_model):
    """One-time transform of the stored (PyTorch-layout, pre-transposed)
    weights into the kernel layout:
      wq/wk/wv: (D, H*Dh) -> (H, D, Dh)   (head-major columns, h is major)
      bq/bk/bv: (H*Dh,)   -> (H, 1, Dh)
      wo:       (H*Dh, D) unchanged (rows already h-major)
      bo:       (D,)      -> (1, D)
    The softmax scale 1/sqrt(Dh) is folded into wq and bq here.
    """
    H, D = num_heads, d_model
    Dh = D                                   # head_dim == d_model
    scale = 1.0 / math.sqrt(Dh)
    per_head = lambda w: w.reshape(D, H, Dh).transpose(1, 0, 2)
    return {
        "wq": per_head(params["wq"]) * scale,
        "bq": params["bq"].reshape(H, 1, Dh) * scale,
        "wk": per_head(params["wk"]),
        "bk": params["bk"].reshape(H, 1, Dh),
        "wv": per_head(params["wv"]),
        "bv": params["bv"].reshape(H, 1, Dh),
        "wo": params["wo"],
        "bo": params["bo"].reshape(1, D),
    }


# --------------------------------- wrapper ------------------------------------


def _pick_query_tile(n):
    for cand in (256, 128):
        if n > cand and n % cand == 0:
            return cand
    return n


def _vmem_limit_bytes(n, tq, d, h, dh, in_itemsize):
    f32, mm = 4, 2
    io = 2 * (tq * d + 2 * n * d) * in_itemsize          # dbl-buffered q, k, v
    out = 2 * tq * d * in_itemsize                       # dbl-buffered output
    w = (3 * h * d * dh + h * dh * d + 3 * h * dh + d) * f32   # single-buffered
    inter = (tq * n * (f32 + f32 + mm)                   # s, p (f32) + p (bf16)
             + (tq + 2 * n) * dh * (f32 + mm)            # qh/kh/vh (+ casts)
             + tq * h * dh * (f32 + mm)                  # o_all
             + tq * d * f32)                             # out accumulator
    derived = 2 * (io + out + w + inter)                 # 2x safety factor
    return int(min(max(derived, 16 * 1024 * 1024), 64 * 1024 * 1024))


def full_patch_attention(q, k, v, prep, num_heads, *, precise=False):
    """Forward pass equivalent of FullPatchAttention.forward
    (eval mode, dropout_p=0, is_causal=False).

    `prep` is the output of prepare_params(). `precise=True` keeps matmuls in
    the input dtype and uses exact division (training / strict-eval path)."""
    B, N, D = q.shape
    H = num_heads
    Dh = prep["wq"].shape[-1]
    HD = H * Dh

    TQ = _pick_query_tile(N)
    grid = (B, N // TQ)

    matmul_dtype = (q.dtype if (precise or q.dtype == jnp.bfloat16)
                    else jnp.bfloat16)

    kernel = functools.partial(
        _fused_attention_kernel,
        num_heads=H, matmul_dtype=matmul_dtype, approx_recip=not precise)

    q_spec = pl.BlockSpec((1, TQ, D), lambda b, qi: (b, qi, 0))
    kv_spec = pl.BlockSpec((1, N, D), lambda b, qi: (b, 0, 0))
    # Constant block index + single buffer -> weights DMA'd once, stay resident.
    w3 = lambda shape: pl.BlockSpec(shape, lambda b, qi: (0, 0, 0),
                                    pipeline_mode=pl.Buffered(1))
    w2 = lambda shape: pl.BlockSpec(shape, lambda b, qi: (0, 0),
                                    pipeline_mode=pl.Buffered(1))

    return pl.pallas_call(
        kernel,
        out_shape=jax.ShapeDtypeStruct((B, N, D), q.dtype),
        grid=grid,
        in_specs=[
            q_spec, kv_spec, kv_spec,                 # q, k, v
            w3((H, D, Dh)), w3((H, D, Dh)), w3((H, D, Dh)),   # wq, wk, wv
            w2((HD, D)),                              # wo
            w3((H, 1, Dh)), w3((H, 1, Dh)), w3((H, 1, Dh)),   # bq, bk, bv
            w2((1, D)),                               # bo
        ],
        out_specs=pl.BlockSpec((1, TQ, D), lambda b, qi: (b, qi, 0)),
        compiler_params=pltpu.CompilerParams(
            dimension_semantics=("parallel", "parallel"),
            vmem_limit_bytes=_vmem_limit_bytes(
                N, TQ, D, H, Dh, jnp.dtype(q.dtype).itemsize)),
    )(q, k, v,
      prep["wq"], prep["wk"], prep["wv"], prep["wo"],
      prep["bq"], prep["bk"], prep["bv"], prep["bo"])


# -------------------------------- reference ------------------------------------


def full_patch_attention_ref(q, k, v, params, num_heads):
    """Pure-JAX reference for correctness checking."""
    B, N, D = q.shape
    H = num_heads
    lin = lambda x, w, b: jnp.einsum("bnd,de->bne", x, w) + b
    qp = lin(q, params["wq"], params["bq"])
    kp = lin(k, params["wk"], params["bk"])
    vp = lin(v, params["wv"], params["bv"])
    sh = lambda x: x.reshape(B, N, H, D).transpose(0, 2, 1, 3)
    qh, kh, vh = sh(qp), sh(kp), sh(vp)
    s = jnp.einsum("bhnd,bhmd->bhnm", qh, kh) / math.sqrt(D)
    p = jax.nn.softmax(s, axis=-1)
    o = jnp.einsum("bhnm,bhmd->bhnd", p, vh)
    o = o.transpose(0, 2, 1, 3).reshape(B, N, H * D)
    return lin(o, params["wo"], params["bo"])


# ---------------------------------- main ---------------------------------------


def _init_params(key, d_model, num_heads):
    """Deterministic parameter init (shapes follow nn.Linear in __init__),
    stored transposed as (D_in, D_out)."""
    dm_h = d_model * num_heads
    ks = jax.random.split(key, 8)
    u = lambda k, shape, fan_in: jax.random.uniform(
        k, shape, jnp.float32, -1.0 / math.sqrt(fan_in), 1.0 / math.sqrt(fan_in))
    return {
        "wq": u(ks[0], (d_model, dm_h), d_model),
        "bq": u(ks[1], (dm_h,), d_model),
        "wk": u(ks[2], (d_model, dm_h), d_model),
        "bk": u(ks[3], (dm_h,), d_model),
        "wv": u(ks[4], (d_model, dm_h), d_model),
        "bv": u(ks[5], (dm_h,), d_model),
        "wo": u(ks[6], (dm_h, d_model), dm_h),
        "bo": u(ks[7], (d_model,), dm_h),
    }


if __name__ == "__main__":
    B, N, D_MODEL, H = 2, 8, 32, 2

    key = jax.random.PRNGKey(0)
    kq, kk, kv, kp = jax.random.split(key, 4)
    q = jax.random.normal(kq, (B, N, D_MODEL), jnp.float32)
    k = jax.random.normal(kk, (B, N, D_MODEL), jnp.float32)
    v = jax.random.normal(kv, (B, N, D_MODEL), jnp.float32)

    params = _init_params(kp, D_MODEL, H)
    prep = prepare_params(params, num_heads=H, d_model=D_MODEL)
    ref = full_patch_attention_ref(q, k, v, params, H)

    # Default (performance) path: bf16 matmul operands + approximate EUP
    # reciprocal -> ~1e-2-level absolute deviation expected at these scales.
    out = jax.block_until_ready(full_patch_attention(q, k, v, prep, H))
    assert out.shape == (B, N, D_MODEL)
    assert jnp.allclose(out, ref, atol=3e-2, rtol=3e-2), \
        "perf path mismatch vs reference"

    # Precise path: input-dtype matmuls, exact division.
    out_precise = jax.block_until_ready(
        full_patch_attention(q, k, v, prep, H, precise=True))
    assert jnp.allclose(out_precise, ref, atol=5e-3, rtol=5e-3), \
        "precise path mismatch vs reference"

    print("KERNEL_OK")
</pallas_src>

<mosaic_0001>
module attributes {stable_mosaic.version = 11 : i64} {
  func.func @_fused_attention_kernel(%arg0: i32, %arg1: i32, %arg2: memref<1x8x32xf32, #tpu.memory_space<vmem>>, %arg3: memref<1x8x32xf32, #tpu.memory_space<vmem>>, %arg4: memref<1x8x32xf32, #tpu.memory_space<vmem>>, %arg5: memref<2x32x32xf32, #tpu.memory_space<vmem>>, %arg6: memref<2x32x32xf32, #tpu.memory_space<vmem>>, %arg7: memref<2x32x32xf32, #tpu.memory_space<vmem>>, %arg8: memref<64x32xf32, #tpu.memory_space<vmem>>, %arg9: memref<2x1x32xf32, #tpu.memory_space<vmem>>, %arg10: memref<2x1x32xf32, #tpu.memory_space<vmem>>, %arg11: memref<2x1x32xf32, #tpu.memory_space<vmem>>, %arg12: memref<1x32xf32, #tpu.memory_space<vmem>>, %arg13: memref<1x8x32xf32, #tpu.memory_space<vmem>>) attributes {dimension_semantics = [#tpu.dimension_semantics<parallel>, #tpu.dimension_semantics<parallel>], iteration_bounds = array<i64: 2, 1>, scalar_prefetch = 0 : i64, scratch_operands = 0 : i64, tpu.core_type = #tpu.core_type<tc>, window_params = [{transform_indices = @transform_0, window_bounds = array<i64: 1, 8, 32>}, {transform_indices = @transform_1, window_bounds = array<i64: 1, 8, 32>}, {transform_indices = @transform_2, window_bounds = array<i64: 1, 8, 32>}, {pipeline_mode = #tpu.pipeline_mode<synchronous>, transform_indices = @transform_3, window_bounds = array<i64: 2, 32, 32>}, {pipeline_mode = #tpu.pipeline_mode<synchronous>, transform_indices = @transform_4, window_bounds = array<i64: 2, 32, 32>}, {pipeline_mode = #tpu.pipeline_mode<synchronous>, transform_indices = @transform_5, window_bounds = array<i64: 2, 32, 32>}, {pipeline_mode = #tpu.pipeline_mode<synchronous>, transform_indices = @transform_6, window_bounds = array<i64: 64, 32>}, {pipeline_mode = #tpu.pipeline_mode<synchronous>, transform_indices = @transform_7, window_bounds = array<i64: 2, 1, 32>}, {pipeline_mode = #tpu.pipeline_mode<synchronous>, transform_indices = @transform_8, window_bounds = array<i64: 2, 1, 32>}, {pipeline_mode = #tpu.pipeline_mode<synchronous>, transform_indices = @transform_9, window_bounds = array<i64: 2, 1, 32>}, {pipeline_mode = #tpu.pipeline_mode<synchronous>, transform_indices = @transform_10, window_bounds = array<i64: 1, 32>}, {transform_indices = @transform_11, window_bounds = array<i64: 1, 8, 32>}]} {
    %c0 = arith.constant 0 : index
    %c0_0 = arith.constant 0 : index
    %c0_1 = arith.constant 0 : index
    %0 = vector.load %arg2[%c0, %c0_0, %c0_1] : memref<1x8x32xf32, #tpu.memory_space<vmem>>, vector<1x8x32xf32>
    %1 = vector.shape_cast %0 : vector<1x8x32xf32> to vector<8x32xf32>
    %2 = arith.truncf %1 : vector<8x32xf32> to vector<8x32xbf16>
    %c0_2 = arith.constant 0 : index
    %c0_3 = arith.constant 0 : index
    %c0_4 = arith.constant 0 : index
    %3 = vector.load %arg3[%c0_2, %c0_3, %c0_4] : memref<1x8x32xf32, #tpu.memory_space<vmem>>, vector<1x8x32xf32>
    %4 = vector.shape_cast %3 : vector<1x8x32xf32> to vector<8x32xf32>
    %5 = arith.truncf %4 : vector<8x32xf32> to vector<8x32xbf16>
    %c0_5 = arith.constant 0 : index
    %c0_6 = arith.constant 0 : index
    %c0_7 = arith.constant 0 : index
    %6 = vector.load %arg4[%c0_5, %c0_6, %c0_7] : memref<1x8x32xf32, #tpu.memory_space<vmem>>, vector<1x8x32xf32>
    %7 = vector.shape_cast %6 : vector<1x8x32xf32> to vector<8x32xf32>
    %8 = arith.truncf %7 : vector<8x32xf32> to vector<8x32xbf16>
    %c0_8 = arith.constant 0 : index
    %c0_9 = arith.constant 0 : index
    %c0_10 = arith.constant 0 : index
    %9 = vector.load %arg5[%c0_8, %c0_9, %c0_10] : memref<2x32x32xf32, #tpu.memory_space<vmem>>, vector<1x32x32xf32>
    %10 = vector.shape_cast %9 : vector<1x32x32xf32> to vector<32x32xf32>
    %11 = arith.truncf %10 : vector<32x32xf32> to vector<32x32xbf16>
    %c0_11 = arith.constant 0 : index
    %c0_12 = arith.constant 0 : index
    %c0_13 = arith.constant 0 : index
    %12 = vector.load %arg6[%c0_11, %c0_12, %c0_13] : memref<2x32x32xf32, #tpu.memory_space<vmem>>, vector<1x32x32xf32>
    %13 = vector.shape_cast %12 : vector<1x32x32xf32> to vector<32x32xf32>
    %14 = arith.truncf %13 : vector<32x32xf32> to vector<32x32xbf16>
    %c0_14 = arith.constant 0 : index
    %c0_15 = arith.constant 0 : index
    %c0_16 = arith.constant 0 : index
    %15 = vector.load %arg7[%c0_14, %c0_15, %c0_16] : memref<2x32x32xf32, #tpu.memory_space<vmem>>, vector<1x32x32xf32>
    %16 = vector.shape_cast %15 : vector<1x32x32xf32> to vector<32x32xf32>
    %17 = arith.truncf %16 : vector<32x32xf32> to vector<32x32xbf16>
    %cst = arith.constant dense<0.000000e+00> : vector<8x32xf32>
    %18 = tpu.matmul %2, %11, %cst {dimension_numbers = #tpu.dot_dimension_numbers<[1], [0], [0], [1], [0, 0, 1, 1], [], []>} : vector<8x32xbf16>, vector<32x32xbf16>, vector<8x32xf32> -> vector<8x32xf32>
    %c0_17 = arith.constant 0 : index
    %c0_18 = arith.constant 0 : index
    %c0_19 = arith.constant 0 : index
    %19 = vector.load %arg9[%c0_17, %c0_18, %c0_19] : memref<2x1x32xf32, #tpu.memory_space<vmem>>, vector<1x1x32xf32>
    %20 = vector.shape_cast %19 : vector<1x1x32xf32> to vector<1x32xf32>
    %21 = vector.broadcast %20 : vector<1x32xf32> to vector<8x32xf32>
    %22 = arith.addf %18, %21 : vector<8x32xf32>
    %23 = arith.truncf %22 : vector<8x32xf32> to vector<8x32xbf16>
    %cst_20 = arith.constant dense<0.000000e+00> : vector<8x32xf32>
    %24 = tpu.matmul %5, %14, %cst_20 {dimension_numbers = #tpu.dot_dimension_numbers<[1], [0], [0], [1], [0, 0, 1, 1], [], []>} : vector<8x32xbf16>, vector<32x32xbf16>, vector<8x32xf32> -> vector<8x32xf32>
    %c0_21 = arith.constant 0 : index
    %c0_22 = arith.constant 0 : index
    %c0_23 = arith.constant 0 : index
    %25 = vector.load %arg10[%c0_21, %c0_22, %c0_23] : memref<2x1x32xf32, #tpu.memory_space<vmem>>, vector<1x1x32xf32>
    %26 = vector.shape_cast %25 : vector<1x1x32xf32> to vector<1x32xf32>
    %27 = vector.broadcast %26 : vector<1x32xf32> to vector<8x32xf32>
    %28 = arith.addf %24, %27 : vector<8x32xf32>
    %29 = arith.truncf %28 : vector<8x32xf32> to vector<8x32xbf16>
    %cst_24 = arith.constant dense<0.000000e+00> : vector<8x32xf32>
    %30 = tpu.matmul %8, %17, %cst_24 {dimension_numbers = #tpu.dot_dimension_numbers<[1], [0], [0], [1], [0, 0, 1, 1], [], []>} : vector<8x32xbf16>, vector<32x32xbf16>, vector<8x32xf32> -> vector<8x32xf32>
    %c0_25 = arith.constant 0 : index
    %c0_26 = arith.constant 0 : index
    %c0_27 = arith.constant 0 : index
    %31 = vector.load %arg11[%c0_25, %c0_26, %c0_27] : memref<2x1x32xf32, #tpu.memory_space<vmem>>, vector<1x1x32xf32>
    %32 = vector.shape_cast %31 : vector<1x1x32xf32> to vector<1x32xf32>
    %33 = vector.broadcast %32 : vector<1x32xf32> to vector<8x32xf32>
    %34 = arith.addf %30, %33 : vector<8x32xf32>
    %35 = arith.truncf %34 : vector<8x32xf32> to vector<8x32xbf16>
    %cst_28 = arith.constant dense<0.000000e+00> : vector<8x8xf32>
    %36 = tpu.matmul %23, %29, %cst_28 {dimension_numbers = #tpu.dot_dimension_numbers<[1], [1], [0], [0], [0, 0, 1, 0], [], []>} : vector<8x32xbf16>, vector<8x32xbf16>, vector<8x8xf32> -> vector<8x8xf32>
    %cst_29 = arith.constant dense<0xFF800000> : vector<8xf32>
    %37 = vector.multi_reduction <maximumf>, %36, %cst_29 [1] : vector<8x8xf32> to vector<8xf32>
    %38 = vector.shape_cast %37 : vector<8xf32> to vector<8x1xf32>
    %39 = vector.broadcast %38 : vector<8x1xf32> to vector<8x8xf32>
    %40 = arith.subf %36, %39 : vector<8x8xf32>
    %41 = math.exp %40 : vector<8x8xf32>
    %cst_30 = arith.constant dense<0.000000e+00> : vector<8xf32>
    %42 = vector.multi_reduction <add>, %41, %cst_30 [1] : vector<8x8xf32> to vector<8xf32>
    %43 = vector.shape_cast %42 : vector<8xf32> to vector<8x1xf32>
    %44 = arith.truncf %41 : vector<8x8xf32> to vector<8x8xbf16>
    %cst_31 = arith.constant dense<0.000000e+00> : vector<8x32xf32>
    %45 = tpu.matmul %44, %35, %cst_31 {dimension_numbers = #tpu.dot_dimension_numbers<[1], [0], [0], [1], [0, 0, 1, 1], [], []>} : vector<8x8xbf16>, vector<8x32xbf16>, vector<8x32xf32> -> vector<8x32xf32>
    %46 = tpu.reciprocal %43 {approx = true} : vector<8x1xf32> -> vector<8x1xf32>
    %47 = vector.broadcast %46 : vector<8x1xf32> to vector<8x32xf32>
    %48 = arith.mulf %45, %47 : vector<8x32xf32>
    %c1 = arith.constant 1 : index
    %c0_32 = arith.constant 0 : index
    %c0_33 = arith.constant 0 : index
    %49 = vector.load %arg5[%c1, %c0_32, %c0_33] : memref<2x32x32xf32, #tpu.memory_space<vmem>>, vector<1x32x32xf32>
    %50 = vector.shape_cast %49 : vector<1x32x32xf32> to vector<32x32xf32>
    %51 = arith.truncf %50 : vector<32x32xf32> to vector<32x32xbf16>
    %c1_34 = arith.constant 1 : index
    %c0_35 = arith.constant 0 : index
    %c0_36 = arith.constant 0 : index
    %52 = vector.load %arg6[%c1_34, %c0_35, %c0_36] : memref<2x32x32xf32, #tpu.memory_space<vmem>>, vector<1x32x32xf32>
    %53 = vector.shape_cast %52 : vector<1x32x32xf32> to vector<32x32xf32>
    %54 = arith.truncf %53 : vector<32x32xf32> to vector<32x32xbf16>
    %c1_37 = arith.constant 1 : index
    %c0_38 = arith.constant 0 : index
    %c0_39 = arith.constant 0 : index
    %55 = vector.load %arg7[%c1_37, %c0_38, %c0_39] : memref<2x32x32xf32, #tpu.memory_space<vmem>>, vector<1x32x32xf32>
    %56 = vector.shape_cast %55 : vector<1x32x32xf32> to vector<32x32xf32>
    %57 = arith.truncf %56 : vector<32x32xf32> to vector<32x32xbf16>
    %cst_40 = arith.constant dense<0.000000e+00> : vector<8x32xf32>
    %58 = tpu.matmul %2, %51, %cst_40 {dimension_numbers = #tpu.dot_dimension_numbers<[1], [0], [0], [1], [0, 0, 1, 1], [], []>} : vector<8x32xbf16>, vector<32x32xbf16>, vector<8x32xf32> -> vector<8x32xf32>
    %c1_41 = arith.constant 1 : index
    %c0_42 = arith.constant 0 : index
    %c0_43 = arith.constant 0 : index
    %59 = vector.load %arg9[%c1_41, %c0_42, %c0_43] : memref<2x1x32xf32, #tpu.memory_space<vmem>>, vector<1x1x32xf32>
    %60 = vector.shape_cast %59 : vector<1x1x32xf32> to vector<1x32xf32>
    %61 = vector.broadcast %60 : vector<1x32xf32> to vector<8x32xf32>
    %62 = arith.addf %58, %61 : vector<8x32xf32>
    %63 = arith.truncf %62 : vector<8x32xf32> to vector<8x32xbf16>
    %cst_44 = arith.constant dense<0.000000e+00> : vector<8x32xf32>
    %64 = tpu.matmul %5, %54, %cst_44 {dimension_numbers = #tpu.dot_dimension_numbers<[1], [0], [0], [1], [0, 0, 1, 1], [], []>} : vector<8x32xbf16>, vector<32x32xbf16>, vector<8x32xf32> -> vector<8x32xf32>
    %c1_45 = arith.constant 1 : index
    %c0_46 = arith.constant 0 : index
    %c0_47 = arith.constant 0 : index
    %65 = vector.load %arg10[%c1_45, %c0_46, %c0_47] : memref<2x1x32xf32, #tpu.memory_space<vmem>>, vector<1x1x32xf32>
    %66 = vector.shape_cast %65 : vector<1x1x32xf32> to vector<1x32xf32>
    %67 = vector.broadcast %66 : vector<1x32xf32> to vector<8x32xf32>
    %68 = arith.addf %64, %67 : vector<8x32xf32>
    %69 = arith.truncf %68 : vector<8x32xf32> to vector<8x32xbf16>
    %cst_48 = arith.constant dense<0.000000e+00> : vector<8x32xf32>
    %70 = tpu.matmul %8, %57, %cst_48 {dimension_numbers = #tpu.dot_dimension_numbers<[1], [0], [0], [1], [0, 0, 1, 1], [], []>} : vector<8x32xbf16>, vector<32x32xbf16>, vector<8x32xf32> -> vector<8x32xf32>
    %c1_49 = arith.constant 1 : index
    %c0_50 = arith.constant 0 : index
    %c0_51 = arith.constant 0 : index
    %71 = vector.load %arg11[%c1_49, %c0_50, %c0_51] : memref<2x1x32xf32, #tpu.memory_space<vmem>>, vector<1x1x32xf32>
    %72 = vector.shape_cast %71 : vector<1x1x32xf32> to vector<1x32xf32>
    %73 = vector.broadcast %72 : vector<1x32xf32> to vector<8x32xf32>
    %74 = arith.addf %70, %73 : vector<8x32xf32>
    %75 = arith.truncf %74 : vector<8x32xf32> to vector<8x32xbf16>
    %cst_52 = arith.constant dense<0.000000e+00> : vector<8x8xf32>
    %76 = tpu.matmul %63, %69, %cst_52 {dimension_numbers = #tpu.dot_dimension_numbers<[1], [1], [0], [0], [0, 0, 1, 0], [], []>} : vector<8x32xbf16>, vector<8x32xbf16>, vector<8x8xf32> -> vector<8x8xf32>
    %cst_53 = arith.constant dense<0xFF800000> : vector<8xf32>
    %77 = vector.multi_reduction <maximumf>, %76, %cst_53 [1] : vector<8x8xf32> to vector<8xf32>
    %78 = vector.shape_cast %77 : vector<8xf32> to vector<8x1xf32>
    %79 = vector.broadcast %78 : vector<8x1xf32> to vector<8x8xf32>
    %80 = arith.subf %76, %79 : vector<8x8xf32>
    %81 = math.exp %80 : vector<8x8xf32>
    %cst_54 = arith.constant dense<0.000000e+00> : vector<8xf32>
    %82 = vector.multi_reduction <add>, %81, %cst_54 [1] : vector<8x8xf32> to vector<8xf32>
    %83 = vector.shape_cast %82 : vector<8xf32> to vector<8x1xf32>
    %84 = arith.truncf %81 : vector<8x8xf32> to vector<8x8xbf16>
    %cst_55 = arith.constant dense<0.000000e+00> : vector<8x32xf32>
    %85 = tpu.matmul %84, %75, %cst_55 {dimension_numbers = #tpu.dot_dimension_numbers<[1], [0], [0], [1], [0, 0, 1, 1], [], []>} : vector<8x8xbf16>, vector<8x32xbf16>, vector<8x32xf32> -> vector<8x32xf32>
    %86 = tpu.reciprocal %83 {approx = true} : vector<8x1xf32> -> vector<8x1xf32>
    %87 = vector.broadcast %86 : vector<8x1xf32> to vector<8x32xf32>
    %88 = arith.mulf %85, %87 : vector<8x32xf32>
    %89 = tpu.concatenate %48, %88 in 1 : vector<8x32xf32>, vector<8x32xf32> -> vector<8x64xf32>
    %90 = arith.truncf %89 : vector<8x64xf32> to vector<8x64xbf16>
    %c0_56 = arith.constant 0 : index
    %c0_57 = arith.constant 0 : index
    %91 = vector.load %arg8[%c0_56, %c0_57] : memref<64x32xf32, #tpu.memory_space<vmem>>, vector<64x32xf32>
    %92 = arith.truncf %91 : vector<64x32xf32> to vector<64x32xbf16>
    %cst_58 = arith.constant dense<0.000000e+00> : vector<8x32xf32>
    %93 = tpu.matmul %90, %92, %cst_58 {dimension_numbers = #tpu.dot_dimension_numbers<[1], [0], [0], [1], [0, 0, 1, 1], [], []>} : vector<8x64xbf16>, vector<64x32xbf16>, vector<8x32xf32> -> vector<8x32xf32>
    %c0_59 = arith.constant 0 : index
    %c0_60 = arith.constant 0 : index
    %94 = vector.load %arg12[%c0_59, %c0_60] : memref<1x32xf32, #tpu.memory_space<vmem>>, vector<1x32xf32>
    %95 = vector.broadcast %94 : vector<1x32xf32> to vector<8x32xf32>
    %96 = arith.addf %93, %95 : vector<8x32xf32>
    %c0_61 = arith.constant 0 : index
    %c0_62 = arith.constant 0 : index
    %c0_63 = arith.constant 0 : index
    %97 = vector.load %arg13[%c0_61, %c0_62, %c0_63] : memref<1x8x32xf32, #tpu.memory_space<vmem>>, vector<1x8x32xf32>
    %98 = vector.shape_cast %97 : vector<1x8x32xf32> to vector<8x32xf32>
    %99 = vector.shape_cast %96 : vector<8x32xf32> to vector<1x8x32xf32>
    tpu.vector_store %arg13[%c0_61, %c0_62, %c0_63], %99 {strides = array<i32>} : memref<1x8x32xf32, #tpu.memory_space<vmem>>, vector<1x8x32xf32>,
    return
  }
  func.func @transform_0(%arg0: i32, %arg1: i32) -> (i32, i32, i32) {
    %c0_i32 = arith.constant 0 : i32
    %c0_i32_0 = arith.constant 0 : i32
    return %arg0, %arg1, %c0_i32 : i32, i32, i32
  }
  func.func @transform_1(%arg0: i32, %arg1: i32) -> (i32, i32, i32) {
    %c0_i32 = arith.constant 0 : i32
    %c0_i32_0 = arith.constant 0 : i32
    %c0_i32_1 = arith.constant 0 : i32
    return %arg0, %c0_i32, %c0_i32_0 : i32, i32, i32
  }
  func.func @transform_2(%arg0: i32, %arg1: i32) -> (i32, i32, i32) {
    %c0_i32 = arith.constant 0 : i32
    %c0_i32_0 = arith.constant 0 : i32
    %c0_i32_1 = arith.constant 0 : i32
    return %arg0, %c0_i32, %c0_i32_0 : i32, i32, i32
  }
  func.func @transform_3(%arg0: i32, %arg1: i32) -> (i32, i32, i32) {
    %c0_i32 = arith.constant 0 : i32
    %c0_i32_0 = arith.constant 0 : i32
    %c0_i32_1 = arith.constant 0 : i32
    %c0_i32_2 = arith.constant 0 : i32
    return %c0_i32, %c0_i32_0, %c0_i32_1 : i32, i32, i32
  }
  func.func @transform_4(%arg0: i32, %arg1: i32) -> (i32, i32, i32) {
    %c0_i32 = arith.constant 0 : i32
    %c0_i32_0 = arith.constant 0 : i32
    %c0_i32_1 = arith.constant 0 : i32
    %c0_i32_2 = arith.constant 0 : i32
    return %c0_i32, %c0_i32_0, %c0_i32_1 : i32, i32, i32
  }
  func.func @transform_5(%arg0: i32, %arg1: i32) -> (i32, i32, i32) {
    %c0_i32 = arith.constant 0 : i32
    %c0_i32_0 = arith.constant 0 : i32
    %c0_i32_1 = arith.constant 0 : i32
    %c0_i32_2 = arith.constant 0 : i32
    return %c0_i32, %c0_i32_0, %c0_i32_1 : i32, i32, i32
  }
  func.func @transform_6(%arg0: i32, %arg1: i32) -> (i32, i32) {
    %c0_i32 = arith.constant 0 : i32
    %c0_i32_0 = arith.constant 0 : i32
    %c0_i32_1 = arith.constant 0 : i32
    return %c0_i32, %c0_i32_0 : i32, i32
  }
  func.func @transform_7(%arg0: i32, %arg1: i32) -> (i32, i32, i32) {
    %c0_i32 = arith.constant 0 : i32
    %c0_i32_0 = arith.constant 0 : i32
    %c0_i32_1 = arith.constant 0 : i32
    %c0_i32_2 = arith.constant 0 : i32
    return %c0_i32, %c0_i32_0, %c0_i32_1 : i32, i32, i32
  }
  func.func @transform_8(%arg0: i32, %arg1: i32) -> (i32, i32, i32) {
    %c0_i32 = arith.constant 0 : i32
    %c0_i32_0 = arith.constant 0 : i32
    %c0_i32_1 = arith.constant 0 : i32
    %c0_i32_2 = arith.constant 0 : i32
    return %c0_i32, %c0_i32_0, %c0_i32_1 : i32, i32, i32
  }
  func.func @transform_9(%arg0: i32, %arg1: i32) -> (i32, i32, i32) {
    %c0_i32 = arith.constant 0 : i32
    %c0_i32_0 = arith.constant 0 : i32
    %c0_i32_1 = arith.constant 0 : i32
    %c0_i32_2 = arith.constant 0 : i32
    return %c0_i32, %c0_i32_0, %c0_i32_1 : i32, i32, i32
  }
  func.func @transform_10(%arg0: i32, %arg1: i32) -> (i32, i32) {
    %c0_i32 = arith.constant 0 : i32
    %c0_i32_0 = arith.constant 0 : i32
    %c0_i32_1 = arith.constant 0 : i32
    return %c0_i32, %c0_i32_0 : i32, i32
  }
  func.func @transform_11(%arg0: i32, %arg1: i32) -> (i32, i32, i32) {
    %c0_i32 = arith.constant 0 : i32
    %c0_i32_0 = arith.constant 0 : i32
    return %arg0, %arg1, %c0_i32 : i32, i32, i32
  }
}

</mosaic_0001>

<llo_original>
// kernel: tpu_custom_call.1
$region0: #{tpu_custom_call.1}
  #allocation0 [shape = 'u32[]', space=smem, size = 0x4, offset = 0x4, fixed_abs, tag = 'smem constant byte address 0x4 - core index']
  #allocation1 [shape = 'u32[144,128]{1,0:T(1,128)}', space=vmem, size = 0x12000, scoped, tag = 'internal scratch']
  %s0 = inlined_call_operand.vmem [shape: f32[2,8,32], index: 0, kind: input, shape index: {}]
  %s1 = inlined_call_operand.vmem [shape: f32[2,8,32], index: 1, kind: input, shape index: {}]
  %s2 = inlined_call_operand.hbm [shape: f32[2,8,32], index: 2, kind: input, shape index: {}]
  %s3 = inlined_call_operand.vmem [shape: f32[2,32,32], index: 3, kind: input, shape index: {}]
  %s4 = inlined_call_operand.hbm [shape: f32[2,32,32], index: 4, kind: input, shape index: {}]
  %s5 = inlined_call_operand.hbm [shape: f32[2,32,32], index: 5, kind: input, shape index: {}]
  %s6 = inlined_call_operand.vmem [shape: f32[64,32], index: 6, kind: input, shape index: {}]
  %s7 = inlined_call_operand.vmem [shape: f32[2,1,32], index: 7, kind: input, shape index: {}]
  %s8 = inlined_call_operand.vmem [shape: f32[2,1,32], index: 8, kind: input, shape index: {}]
  %s9 = inlined_call_operand.vmem [shape: f32[2,1,32], index: 9, kind: input, shape index: {}]
  %s10 = inlined_call_operand.vmem [shape: f32[1,32], index: 10, kind: input, shape index: {}]
  %s11 = inlined_call_operand.hbm [shape: f32[2,8,32], index: 11, kind: output, shape index: {}]
  %s12 = sld [smem:[#allocation0]]
  $region89: #{tpu_custom_call.1} parent=0
    _
  %s14 = ssub.s32 1, %s12
  %s15 = scalar_select 0, %s14, %s12
  $region1: #{tpu_custom_call.1} parent=0
    #allocation2 [shape = 'u8[8192]{0}', space=vmem, size = 0x2000, scoped, tag = 'input window, operand 2']
    #allocation3 [shape = 's32[2]{0}', space=sflag, size = 0x8, scoped, tag = 'scoped memory for tpu_custom_call.1']
    #allocation4 [shape = 's32[2]{0}', space=sflag, size = 0x8, scoped, tag = 'scoped memory for tpu_custom_call.1']
    #allocation5 [shape = 'u8[32768]{0}', space=vmem, size = 0x8000, scoped, tag = 'input window, operand 4, single buffered']
    #allocation6 [shape = 's32[1]{0}', space=sflag, size = 0x4, scoped, tag = 'scoped memory for tpu_custom_call.1']
    #allocation7 [shape = 'u8[32768]{0}', space=vmem, size = 0x8000, scoped, tag = 'input window, operand 5, single buffered']
    #allocation8 [shape = 'u8[8192]{0}', space=vmem, size = 0x2000, scoped, tag = 'output window, operand 0']
    %16 = vsyncpa [#allocation3], 0
    %s17 = scalar_lea.sflag [#allocation3], 1
    %18 = vsyncpa %s17, 0
    %19 = vsyncpa [#allocation6], 0
    %20 = vsyncpa [#allocation4], 0
    %s21 = scalar_lea.sflag [#allocation4], 1
    %22 = vsyncpa %s21, 0
    loop: start=0, step=1, limit=4
    $region2: #{tpu_custom_call.1} parent=1 // loop_pre_header
      _
    $region3: #{tpu_custom_call.1} parent=1 // loop_header
      %s24 = sphi 0, %s28
      %p25 = scmp.ge.s32.totalorder %s24, 4
      %s31 = sphi 0, %s43
      %s32 = sphi 0, %s39
      %s33 = sphi 0, %s31
      %s34 = sphi 0, %s32
      %s35 = sphi 0, %s33
      %s36 = sphi 0, %s34
      %s48 = sphi 0, %s50
      %s51 = sphi 0, %s48
      %s52 = sphi 0, %s51
      %s68 = sphi 0, %s52
      %s74 = sphi 0, %s76
      %s77 = sphi 0, %s74
      %s78 = sphi 0, %s77
      %s94 = sphi 0, %s78
      %s100 = sphi 0, %s102
      %s103 = sphi 0, %s100
      %s104 = sphi 0, %s103
      %s120 = sphi 0, %s104
      %s124 = sphi 0, %s124
      %s126 = sphi 0, %s124
      %s127 = sphi 0, %s126
      %s141 = sphi 0, %s127
      %s145 = sphi 0, %s145
      %s147 = sphi 0, %s145
      %s148 = sphi 0, %s147
      %s162 = sphi 0, %s148
      %s166 = sphi 0, %s166
      %s168 = sphi 0, %s166
      %s169 = sphi 0, %s168
      %s183 = sphi 0, %s169
      %s187 = sphi 0, %s187
      %s189 = sphi 0, %s187
      %s190 = sphi 0, %s189
      %s204 = sphi 0, %s190
      %s208 = sphi 0, %s208
      %s210 = sphi 0, %s208
      %s211 = sphi 0, %s210
      %s225 = sphi 0, %s211
      %s229 = sphi 0, %s229
      %s231 = sphi 0, %s229
      %s232 = sphi 0, %s231
      %s246 = sphi 0, %s232
      %s250 = sphi 0, %s250
      %s252 = sphi 0, %s250
      %s253 = sphi 0, %s252
      %s267 = sphi 0, %s253
      %s271 = sphi 0, %s271
      %s273 = sphi 0, %s271
      %s274 = sphi 0, %s273
      %s288 = sphi 0, %s274
      %s296 = sphi 0, %s298
      %s299 = sphi 0, %s296
      %s300 = sphi 0, %s299
      %s316 = sphi 0, %s300
    $region4: #{tpu_custom_call.1} parent=1 // loop_header_branch
      %27 = sbr.rel (%p25) target = $region8
    $region5: #{tpu_custom_call.1} parent=1 // loop_body
      %s29 = ssub.s32 %s24, 1
      %s30 = ssub.s32 %s24, 2
      %s37 = sadd.s32 1, %s32
      %p38 = scmp.ge.s32.totalorder %s37, 1
      %s39 = scalar_select %p38, 0, %s37
      %s40 = sadd.s32 1, %s31
      %s41 = scalar_select %p38, %s40, %s31
      %p42 = scmp.ge.s32.totalorder %s41, 2
      %s43 = scalar_select %p42, 0, %s41
      %s44 = ssub.s32 %s31, %s43
      %s45 = ssub.s32 %s32, %s39
      %s46 = sor.u32 %s44, %s45
      %p47 = scmp.eq.s32.totalorder %s46, 0
      %s49 = sadd.s32 %s48, 1
      %s50 = scalar_select %p47, %s48, %s49
      %p53 = pneg %p47
      %p54 = scmp.eq.s32.totalorder %s24, 1
      %p55 = por %p53, %p54
      %p56 = scmp.ne.s32.totalorder %s48, %s51
      %p57 = scmp.eq.s32.totalorder %s24, 0
      %p58 = por %p56, %p57
      %p59 = scmp.ne.s32.totalorder %s48, %s51
      %p60 = scmp.eq.s32.totalorder %s29, 1
      %p61 = por %p59, %p60
      %p62 = scmp.ne.s32.totalorder %s51, %s52
      %p63 = scmp.eq.s32.totalorder %s29, 0
      %p64 = por %p62, %p63
      %p65 = scmp.ne.s32.totalorder %s51, %s52
      %p66 = scmp.eq.s32.totalorder %s30, 1
      %p67 = por %p65, %p66
      %p69 = scmp.ne.s32.totalorder %s52, %s68
      %p70 = scmp.eq.s32.totalorder %s30, 0
      %p71 = por %p69, %p70
      %s72 = ssub.s32 %s31, %s43
      %p73 = scmp.eq.s32.totalorder %s72, 0
      %s75 = sadd.s32 %s74, 1
      %s76 = scalar_select %p73, %s74, %s75
      %p79 = pneg %p73
      %p80 = scmp.eq.s32.totalorder %s24, 1
      %p81 = por %p79, %p80
      %p82 = scmp.ne.s32.totalorder %s74, %s77
      %p83 = scmp.eq.s32.totalorder %s24, 0
      %p84 = por %p82, %p83
      %p85 = scmp.ne.s32.totalorder %s74, %s77
      %p86 = scmp.eq.s32.totalorder %s29, 1
      %p87 = por %p85, %p86
      %p88 = scmp.ne.s32.totalorder %s77, %s78
      %p89 = scmp.eq.s32.totalorder %s29, 0
      %p90 = por %p88, %p89
      %p91 = scmp.ne.s32.totalorder %s77, %s78
      %p92 = scmp.eq.s32.totalorder %s30, 1
      %p93 = por %p91, %p92
      %p95 = scmp.ne.s32.totalorder %s78, %s94
      %p96 = scmp.eq.s32.totalorder %s30, 0
      %p97 = por %p95, %p96
      %s98 = ssub.s32 %s31, %s43
      %p99 = scmp.eq.s32.totalorder %s98, 0
      %s101 = sadd.s32 %s100, 1
      %s102 = scalar_select %p99, %s100, %s101
      %p105 = pneg %p99
      %p106 = scmp.eq.s32.totalorder %s24, 1
      %p107 = por %p105, %p106
      %p108 = scmp.ne.s32.totalorder %s100, %s103
      %p109 = scmp.eq.s32.totalorder %s24, 0
      %p110 = por %p108, %p109
      %p111 = scmp.ne.s32.totalorder %s100, %s103
      %p112 = scmp.eq.s32.totalorder %s29, 1
      %p113 = por %p111, %p112
      %p114 = scmp.ne.s32.totalorder %s103, %s104
      %p115 = scmp.eq.s32.totalorder %s29, 0
      %p116 = por %p114, %p115
      %p117 = scmp.ne.s32.totalorder %s103, %s104
      %p118 = scmp.eq.s32.totalorder %s30, 1
      %p119 = por %p117, %p118
      %p121 = scmp.ne.s32.totalorder %s104, %s120
      %p122 = scmp.eq.s32.totalorder %s30, 0
      %p123 = por %p121, %p122
      %s125 = sadd.s32 %s124, 1
      %p128 = scmp.eq.s32.totalorder %s24, 1
      %p129 = scmp.ne.s32.totalorder %s124, %s126
      %p130 = scmp.eq.s32.totalorder %s24, 0
      %p131 = por %p129, %p130
      %p132 = scmp.ne.s32.totalorder %s124, %s126
      %p133 = scmp.eq.s32.totalorder %s29, 1
      %p134 = por %p132, %p133
      %p135 = scmp.ne.s32.totalorder %s126, %s127
      %p136 = scmp.eq.s32.totalorder %s29, 0
      %p137 = por %p135, %p136
      %p138 = scmp.ne.s32.totalorder %s126, %s127
      %p139 = scmp.eq.s32.totalorder %s30, 1
      %p140 = por %p138, %p139
      %p142 = scmp.ne.s32.totalorder %s127, %s141
      %p143 = scmp.eq.s32.totalorder %s30, 0
      %p144 = por %p142, %p143
      %s146 = sadd.s32 %s145, 1
      %p149 = scmp.eq.s32.totalorder %s24, 1
      %p150 = scmp.ne.s32.totalorder %s145, %s147
      %p151 = scmp.eq.s32.totalorder %s24, 0
      %p152 = por %p150, %p151
      %p153 = scmp.ne.s32.totalorder %s145, %s147
      %p154 = scmp.eq.s32.totalorder %s29, 1
      %p155 = por %p153, %p154
      %p156 = scmp.ne.s32.totalorder %s147, %s148
      %p157 = scmp.eq.s32.totalorder %s29, 0
      %p158 = por %p156, %p157
      %p159 = scmp.ne.s32.totalorder %s147, %s148
      %p160 = scmp.eq.s32.totalorder %s30, 1
      %p161 = por %p159, %p160
      %p163 = scmp.ne.s32.totalorder %s148, %s162
      %p164 = scmp.eq.s32.totalorder %s30, 0
      %p165 = por %p163, %p164
      %s167 = sadd.s32 %s166, 1
      %p170 = scmp.eq.s32.totalorder %s24, 1
      %p171 = scmp.ne.s32.totalorder %s166, %s168
      %p172 = scmp.eq.s32.totalorder %s24, 0
      %p173 = por %p171, %p172
      %p174 = scmp.ne.s32.totalorder %s166, %s168
      %p175 = scmp.eq.s32.totalorder %s29, 1
      %p176 = por %p174, %p175
      %p177 = scmp.ne.s32.totalorder %s168, %s169
      %p178 = scmp.eq.s32.totalorder %s29, 0
      %p179 = por %p177, %p178
      %p180 = scmp.ne.s32.totalorder %s168, %s169
      %p181 = scmp.eq.s32.totalorder %s30, 1
      %p182 = por %p180, %p181
      %p184 = scmp.ne.s32.totalorder %s169, %s183
      %p185 = scmp.eq.s32.totalorder %s30, 0
      %p186 = por %p184, %p185
      %s188 = sadd.s32 %s187, 1
      %p191 = scmp.eq.s32.totalorder %s24, 1
      %p192 = scmp.ne.s32.totalorder %s187, %s189
      %p193 = scmp.eq.s32.totalorder %s24, 0
      %p194 = por %p192, %p193
      %p195 = scmp.ne.s32.totalorder %s187, %s189
      %p196 = scmp.eq.s32.totalorder %s29, 1
      %p197 = por %p195, %p196
      %p198 = scmp.ne.s32.totalorder %s189, %s190
      %p199 = scmp.eq.s32.totalorder %s29, 0
      %p200 = por %p198, %p199
      %p201 = scmp.ne.s32.totalorder %s189, %s190
      %p202 = scmp.eq.s32.totalorder %s30, 1
      %p203 = por %p201, %p202
      %p205 = scmp.ne.s32.totalorder %s190, %s204
      %p206 = scmp.eq.s32.totalorder %s30, 0
      %p207 = por %p205, %p206
      %s209 = sadd.s32 %s208, 1
      %p212 = scmp.eq.s32.totalorder %s24, 1
      %p213 = scmp.ne.s32.totalorder %s208, %s210
      %p214 = scmp.eq.s32.totalorder %s24, 0
      %p215 = por %p213, %p214
      %p216 = scmp.ne.s32.totalorder %s208, %s210
      %p217 = scmp.eq.s32.totalorder %s29, 1
      %p218 = por %p216, %p217
      %p219 = scmp.ne.s32.totalorder %s210, %s211
      %p220 = scmp.eq.s32.totalorder %s29, 0
      %p221 = por %p219, %p220
      %p222 = scmp.ne.s32.totalorder %s210, %s211
      %p223 = scmp.eq.s32.totalorder %s30, 1
      %p224 = por %p222, %p223
      %p226 = scmp.ne.s32.totalorder %s211, %s225
      %p227 = scmp.eq.s32.totalorder %s30, 0
      %p228 = por %p226, %p227
      %s230 = sadd.s32 %s229, 1
      %p233 = scmp.eq.s32.totalorder %s24, 1
      %p234 = scmp.ne.s32.totalorder %s229, %s231
      %p235 = scmp.eq.s32.totalorder %s24, 0
      %p236 = por %p234, %p235
      %p237 = scmp.ne.s32.totalorder %s229, %s231
      %p238 = scmp.eq.s32.totalorder %s29, 1
      %p239 = por %p237, %p238
      %p240 = scmp.ne.s32.totalorder %s231, %s232
      %p241 = scmp.eq.s32.totalorder %s29, 0
      %p242 = por %p240, %p241
      %p243 = scmp.ne.s32.totalorder %s231, %s232
      %p244 = scmp.eq.s32.totalorder %s30, 1
      %p245 = por %p243, %p244
      %p247 = scmp.ne.s32.totalorder %s232, %s246
      %p248 = scmp.eq.s32.totalorder %s30, 0
      %p249 = por %p247, %p248
      %s251 = sadd.s32 %s250, 1
      %p254 = scmp.eq.s32.totalorder %s24, 1
      %p255 = scmp.ne.s32.totalorder %s250, %s252
      %p256 = scmp.eq.s32.totalorder %s24, 0
      %p257 = por %p255, %p256
      %p258 = scmp.ne.s32.totalorder %s250, %s252
      %p259 = scmp.eq.s32.totalorder %s29, 1
      %p260 = por %p258, %p259
      %p261 = scmp.ne.s32.totalorder %s252, %s253
      %p262 = scmp.eq.s32.totalorder %s29, 0
      %p263 = por %p261, %p262
      %p264 = scmp.ne.s32.totalorder %s252, %s253
      %p265 = scmp.eq.s32.totalorder %s30, 1
      %p266 = por %p264, %p265
      %p268 = scmp.ne.s32.totalorder %s253, %s267
      %p269 = scmp.eq.s32.totalorder %s30, 0
      %p270 = por %p268, %p269
      %s272 = sadd.s32 %s271, 1
      %p275 = scmp.eq.s32.totalorder %s24, 1
      %p276 = scmp.ne.s32.totalorder %s271, %s273
      %p277 = scmp.eq.s32.totalorder %s24, 0
      %p278 = por %p276, %p277
      %p279 = scmp.ne.s32.totalorder %s271, %s273
      %p280 = scmp.eq.s32.totalorder %s29, 1
      %p281 = por %p279, %p280
      %p282 = scmp.ne.s32.totalorder %s273, %s274
      %p283 = scmp.eq.s32.totalorder %s29, 0
      %p284 = por %p282, %p283
      %p285 = scmp.ne.s32.totalorder %s273, %s274
      %p286 = scmp.eq.s32.totalorder %s30, 1
      %p287 = por %p285, %p286
      %p289 = scmp.ne.s32.totalorder %s274, %s288
      %p290 = scmp.eq.s32.totalorder %s30, 0
      %p291 = por %p289, %p290
      %s292 = ssub.s32 %s31, %s43
      %s293 = ssub.s32 %s32, %s39
      %s294 = sor.u32 %s292, %s293
      %p295 = scmp.eq.s32.totalorder %s294, 0
      %s297 = sadd.s32 %s296, 1
      %s298 = scalar_select %p295, %s296, %s297
      %p301 = pneg %p295
      %p302 = scmp.eq.s32.totalorder %s24, 1
      %p303 = por %p301, %p302
      %p304 = scmp.ne.s32.totalorder %s296, %s299
      %p305 = scmp.eq.s32.totalorder %s24, 0
      %p306 = por %p304, %p305
      %p307 = scmp.ne.s32.totalorder %s296, %s299
      %p308 = scmp.eq.s32.totalorder %s29, 1
      %p309 = por %p307, %p308
      %p310 = scmp.ne.s32.totalorder %s299, %s300
      %p311 = scmp.eq.s32.totalorder %s29, 0
      %p312 = por %p310, %p311
      %p313 = scmp.ne.s32.totalorder %s299, %s300
      %p314 = scmp.eq.s32.totalorder %s30, 1
      %p315 = por %p313, %p314
      %p317 = scmp.ne.s32.totalorder %s300, %s316
      %p318 = scmp.eq.s32.totalorder %s30, 0
      %p319 = por %p317, %p318
      %p320 = scmp.le.s32.totalorder 1, %s24
      %p321 = scmp.lt.s32.totalorder %s24, 3
      %p322 = pnand %p320, %p321
      %p323 = pneg %p322
      // Predicated region
      $region9: #{tpu_custom_call.1} parent=5 // pred_check
        _
      $region10: #{tpu_custom_call.1} parent=5 // pred_check_branch
        %325 = sbr.rel (%p322) target = $region12
      $region11: #{tpu_custom_call.1} parent=5 // pred_region
        %s326 = ssub.s32 %s24, 1
        // Predicated region
        $region13: #{tpu_custom_call.1} parent=11 // pred_check
          %p327 = pneg %p137
        $region14: #{tpu_custom_call.1} parent=11 // pred_check_branch
          %329 = sbr.rel (%p327) target = $region16
        $region15: #{tpu_custom_call.1} parent=11 // pred_region
          _
        $region16: #{tpu_custom_call.1} parent=11 // pred_fallthru
          _
        // Predicated region
        $region17: #{tpu_custom_call.1} parent=11 // pred_check
          %p330 = pneg %p158
        $region18: #{tpu_custom_call.1} parent=11 // pred_check_branch
          %332 = sbr.rel (%p330) target = $region20
        $region19: #{tpu_custom_call.1} parent=11 // pred_region
          %s334 = ssub.s32 1024, 1024
          %335 = vsyncadd [#allocation6], %s334
          %s336 = sshll.u32 [#allocation5], 4
          %s337 = int_to_ptr.vmem [resolvable:$true] %s336
          %342 = dma.hbm_to_vmem [thread:$0]  %s4, 1024, %s337, [#allocation6], 128, 128, 8
        $region20: #{tpu_custom_call.1} parent=11 // pred_fallthru
          _
        // Predicated region
        $region21: #{tpu_custom_call.1} parent=11 // pred_check
          %p343 = pneg %p179
        $region22: #{tpu_custom_call.1} parent=11 // pred_check_branch
          %345 = sbr.rel (%p343) target = $region24
        $region23: #{tpu_custom_call.1} parent=11 // pred_region
          %s347 = ssub.s32 1024, 1024
          %348 = vsyncadd [#allocation6], %s347
          %s349 = sshll.u32 [#allocation7], 4
          %s350 = int_to_ptr.vmem [resolvable:$true] %s349
          %355 = dma.hbm_to_vmem [thread:$0]  %s5, 1024, %s350, [#allocation6], 128, 128, 8
        $region24: #{tpu_custom_call.1} parent=11 // pred_fallthru
          _
        // Predicated region
        $region25: #{tpu_custom_call.1} parent=11 // pred_check
          %p356 = pneg %p200
        $region26: #{tpu_custom_call.1} parent=11 // pred_check_branch
          %358 = sbr.rel (%p356) target = $region28
        $region27: #{tpu_custom_call.1} parent=11 // pred_region
          _
        $region28: #{tpu_custom_call.1} parent=11 // pred_fallthru
          _
        // Predicated region
        $region29: #{tpu_custom_call.1} parent=11 // pred_check
          %p359 = pneg %p221
        $region30: #{tpu_custom_call.1} parent=11 // pred_check_branch
          %361 = sbr.rel (%p359) target = $region32
        $region31: #{tpu_custom_call.1} parent=11 // pred_region
          _
        $region32: #{tpu_custom_call.1} parent=11 // pred_fallthru
          _
        // Predicated region
        $region33: #{tpu_custom_call.1} parent=11 // pred_check
          %p362 = pneg %p242
        $region34: #{tpu_custom_call.1} parent=11 // pred_check_branch
          %364 = sbr.rel (%p362) target = $region36
        $region35: #{tpu_custom_call.1} parent=11 // pred_region
          _
        $region36: #{tpu_custom_call.1} parent=11 // pred_fallthru
          _
        // Predicated region
        $region37: #{tpu_custom_call.1} parent=11 // pred_check
          %p365 = pneg %p263
        $region38: #{tpu_custom_call.1} parent=11 // pred_check_branch
          %367 = sbr.rel (%p365) target = $region40
        $region39: #{tpu_custom_call.1} parent=11 // pred_region
          _
        $region40: #{tpu_custom_call.1} parent=11 // pred_fallthru
          _
        // Predicated region
        $region41: #{tpu_custom_call.1} parent=11 // pred_check
          %p368 = pneg %p284
        $region42: #{tpu_custom_call.1} parent=11 // pred_check_branch
          %370 = sbr.rel (%p368) target = $region44
        $region43: #{tpu_custom_call.1} parent=11 // pred_region
          _
        $region44: #{tpu_custom_call.1} parent=11 // pred_fallthru
          _
      $region12: #{tpu_custom_call.1} parent=5 // pred_fallthru
        _
      %p371 = scmp.lt.s32.totalorder %s24, 2
      // Predicated region
      $region45: #{tpu_custom_call.1} parent=5 // pred_check
        %p372 = pneg %p371
      $region46: #{tpu_custom_call.1} parent=5 // pred_check_branch
        %374 = sbr.rel (%p372) target = $region48
      $region47: #{tpu_custom_call.1} parent=5 // pred_region
        // Predicated region
        $region49: #{tpu_custom_call.1} parent=47 // pred_check
          %p375 = pneg %p58
        $region50: #{tpu_custom_call.1} parent=47 // pred_check_branch
          %377 = sbr.rel (%p375) target = $region52
        $region51: #{tpu_custom_call.1} parent=47 // pred_region
          %p378 = scmp.lt.s32.totalorder %s31, 1
          %s379 = scalar_select %p378, %s31, 1
          %p380 = scmp.lt.s32.totalorder %s32, 0
          %s381 = scalar_select %p380, %s32, 0
          %s382 = sadd.s32 %s381, %s379
          %s383 = smul.addr %s382, 8
          %s384 = scalar_lea.vmem %s0, %s383
        $region52: #{tpu_custom_call.1} parent=47 // pred_fallthru
          _
        // Predicated region
        $region53: #{tpu_custom_call.1} parent=47 // pred_check
          %p385 = pneg %p84
        $region54: #{tpu_custom_call.1} parent=47 // pred_check_branch
          %387 = sbr.rel (%p385) target = $region56
        $region55: #{tpu_custom_call.1} parent=47 // pred_region
          %p388 = scmp.lt.s32.totalorder %s31, 1
          %s389 = scalar_select %p388, %s31, 1
          %s390 = smul.addr %s389, 8
          %s391 = scalar_lea.vmem %s1, %s390
        $region56: #{tpu_custom_call.1} parent=47 // pred_fallthru
          _
        // Predicated region
        $region57: #{tpu_custom_call.1} parent=47 // pred_check
          %p392 = pneg %p110
        $region58: #{tpu_custom_call.1} parent=47 // pred_check_branch
          %394 = sbr.rel (%p392) target = $region60
        $region59: #{tpu_custom_call.1} parent=47 // pred_region
          %s395 = sand.u32 %s100, 1
          %s396 = scalar_lea.sflag [#allocation3], %s395
          %s397 = sand.u32 %s100, 1
          %s398 = smul.addr %s397, 8
          %s399 = scalar_lea.vmem [#allocation2], %s398
          %s401 = ssub.s32 128, 128
          %402 = vsyncadd %s396, %s401
          %s403 = smul.addr %s31, 128
          %s404 = scalar_lea.hbm %s2, %s403
          %s406 = sshll.u32 %s399, 4
          %s407 = int_to_ptr.vmem [resolvable:$true] %s406
          %409 = dma.hbm_to_vmem [thread:$0]  %s404, 128, %s407, %s396
        $region60: #{tpu_custom_call.1} parent=47 // pred_fallthru
          _
      $region48: #{tpu_custom_call.1} parent=5 // pred_fallthru
        _
      %p410 = scmp.le.s32.totalorder 1, %s24
      %p411 = scmp.lt.s32.totalorder %s24, 3
      %p412 = pnand %p410, %p411
      %p413 = pneg %p412
      // Predicated region
      $region61: #{tpu_custom_call.1} parent=5 // pred_check
        _
      $region62: #{tpu_custom_call.1} parent=5 // pred_check_branch
        %415 = sbr.rel (%p412) target = $region64
      $region63: #{tpu_custom_call.1} parent=5 // pred_region
        %s416 = ssub.s32 %s24, 1
        %s417 = sand.u32 %s103, 1
        %s418 = scalar_lea.sflag [#allocation3], %s417
        %s419 = sand.u32 %s103, 1
        %s420 = smul.addr %s419, 8
        %s421 = scalar_lea.vmem [#allocation2], %s420
        // Predicated region
        $region65: #{tpu_custom_call.1} parent=63 // pred_check
          %p422 = pneg %p116
        $region66: #{tpu_custom_call.1} parent=63 // pred_check_branch
          %424 = sbr.rel (%p422) target = $region68
        $region67: #{tpu_custom_call.1} parent=63 // pred_region
          %425 = dma.done %s418, 128
        $region68: #{tpu_custom_call.1} parent=63 // pred_fallthru
          _
        // Predicated region
        $region69: #{tpu_custom_call.1} parent=63 // pred_check
          %p426 = pneg %p158
        $region70: #{tpu_custom_call.1} parent=63 // pred_check_branch
          %428 = sbr.rel (%p426) target = $region72
        $region71: #{tpu_custom_call.1} parent=63 // pred_region
          %429 = dma.done [#allocation6], 1024
        $region72: #{tpu_custom_call.1} parent=63 // pred_fallthru
          _
        // Predicated region
        $region73: #{tpu_custom_call.1} parent=63 // pred_check
          %p430 = pneg %p179
        $region74: #{tpu_custom_call.1} parent=63 // pred_check_branch
          %432 = sbr.rel (%p430) target = $region76
        $region75: #{tpu_custom_call.1} parent=63 // pred_region
          %433 = dma.done [#allocation6], 1024
        $region76: #{tpu_custom_call.1} parent=63 // pred_fallthru
          _
        %p434 = scmp.lt.s32.totalorder %s33, 1
        %s435 = scalar_select %p434, %s33, 1
        %p436 = scmp.lt.s32.totalorder %s34, 0
        %s437 = scalar_select %p436, %s34, 0
        %s438 = sadd.s32 %s437, %s435
        %s439 = smul.addr %s438, 8
        %s440 = scalar_lea.vmem %s0, %s439
        %p441 = pneg %p64
        %p442 = pneg %p61
        %p443 = scmp.lt.s32.totalorder %s33, 1
        %s444 = scalar_select %p443, %s33, 1
        %s445 = smul.addr %s444, 8
        %s446 = scalar_lea.vmem %s1, %s445
        %p447 = pneg %p90
        %p448 = pneg %p87
        %s449 = sand.u32 %s103, 1
        %s450 = scalar_lea.sflag [#allocation3], %s449
        %s451 = sand.u32 %s103, 1
        %s452 = smul.addr %s451, 8
        %s453 = scalar_lea.vmem [#allocation2], %s452
        %p454 = pneg %p116
        %p455 = pneg %p113
        %p456 = pneg %p137
        %p457 = pneg %p134
        %p458 = pneg %p158
        %p459 = pneg %p155
        %p460 = pneg %p179
        %p461 = pneg %p176
        %p462 = pneg %p200
        %p463 = pneg %p197
        %p464 = pneg %p221
        %p465 = pneg %p218
        %p466 = pneg %p242
        %p467 = pneg %p239
        %p468 = pneg %p263
        %p469 = pneg %p260
        %p470 = pneg %p284
        %p471 = pneg %p281
        %p472 = pneg %p312
        %p473 = pneg %p309
        %s474 = sand.u32 %s299, 1
        %s475 = scalar_lea.sflag [#allocation4], %s474
        %s476 = sand.u32 %s299, 1
        %s477 = smul.addr %s476, 8
        %s478 = scalar_lea.vmem [#allocation8], %s477
        %p479 = scmp.lt.s32.totalorder %s33, 1
        %s480 = scalar_select %p479, %s33, 1
        %p481 = scmp.lt.s32.totalorder %s34, 0
        %s482 = scalar_select %p481, %s34, 0
        %s483 = sadd.s32 %s482, %s480
        %s484 = smul.addr %s483, 8
        %s485 = scalar_lea.vmem %s0, %s484
        %p486 = scmp.lt.s32.totalorder %s33, 1
        %s487 = scalar_select %p486, %s33, 1
        %s488 = smul.addr %s487, 8
        %s489 = scalar_lea.vmem %s1, %s488
        %v491 = vld [vmem:[%s485] sm:$0xff]
        %v492 = vpack.c.bf16 %v491, %v491
        %v493 = vld [vmem:[%s489] sm:$0xff]
        %v494 = vpack.c.bf16 %v493, %v493
        %v495 = vld [vmem:[%s421] sm:$0xff]
        %v496 = vpack.c.bf16 %v495, %v495
        %v497 = vld [vmem:[%s3] sm:$0xff]
        %v498 = vld [vmem:[%s3 + $0x8] sm:$0xff]
        %v499 = vld [vmem:[%s3 + $0x10] sm:$0xff]
        %v500 = vld [vmem:[%s3 + $0x18] sm:$0xff]
        %v501 = vpack.c.bf16 %v498, %v497
        %v502 = vpack.c.bf16 %v500, %v499
        %v503 = vld [vmem:[#allocation5] sm:$0xff]
        %v504 = vld [vmem:[#allocation5 + $0x8] sm:$0xff]
        %v505 = vld [vmem:[#allocation5 + $0x10] sm:$0xff]
        %v506 = vld [vmem:[#allocation5 + $0x18] sm:$0xff]
        %v507 = vpack.c.bf16 %v504, %v503
        %v508 = vpack.c.bf16 %v506, %v505
        %v509 = vld [vmem:[#allocation7] sm:$0xff]
        %v510 = vld [vmem:[#allocation7 + $0x8] sm:$0xff]
        %v511 = vld [vmem:[#allocation7 + $0x10] sm:$0xff]
        %v512 = vld [vmem:[#allocation7 + $0x18] sm:$0xff]
        %v513 = vpack.c.bf16 %v510, %v509
        %v514 = vpack.c.bf16 %v512, %v511
        %v515 = vld [vmem:[%s7] sm:$0x1]
        %v517 = vlaneseq
        %v518 = vshrl.u32 %v517, 7
        %v519 = vsub.s32 0, %v518
        %v520 = vrot.slane %v515, %v519
        %vm522 = vcmask 261120
        %v524 = vsel %vm522, %v492, 0
        %526 = vmatprep.subr.bf16.mxu0 0
        %527 = vmatpush1.bf16.msra.mxu0 %v501
        %528 = vmatprep.subr.bf16.mxu0 0
        %529 = vmatpush1.bf16.msra.mxu0 %v502
        %530 = vmatprep.subr.bf16.mxu0 0
        %531 = vmatpush1.bf16.msra.mxu0 0
        %532 = vmatprep.subr.bf16.mxu0 0
        %533 = vmatpush1.bf16.msra.mxu0 0
        %534 = vmatprep.subr.bf16.mxu0 0
        %535 = vmatpush1.bf16.msra.mxu0 0
        %536 = vmatprep.subr.bf16.mxu0 0
        %537 = vmatpush1.bf16.msra.mxu0 0
        %538 = vmatprep.subr.bf16.mxu0 0
        %539 = vmatpush1.bf16.msra.mxu0 0
        %540 = vmatprep.subr.bf16.mxu0 0
        %541 = vmatpush1.bf16.msra.mxu0 0
        %542 = vmatprep.subr.bf16.mxu0 0
        %543 = vmatpush1.bf16.msra.mxu0 0
        %544 = vmatprep.subr.bf16.mxu0 0
        %545 = vmatpush1.bf16.msra.mxu0 0
        %546 = vmatprep.subr.bf16.mxu0 0
        %547 = vmatpush1.bf16.msra.mxu0 0
        %548 = vmatprep.subr.bf16.mxu0 0
        %549 = vmatpush1.bf16.msra.mxu0 0
        %550 = vmatprep.subr.bf16.mxu0 0
        %551 = vmatpush1.bf16.msra.mxu0 0
        %552 = vmatprep.subr.bf16.mxu0 0
        %553 = vmatpush1.bf16.msra.mxu0 0
        %554 = vmatprep.subr.bf16.mxu0 0
        %555 = vmatpush1.bf16.msra.mxu0 0
        %556 = vmatprep.subr.bf16.mxu0 0
        %557 = vmatpush1.bf16.msra.mxu0 0
        %558 = vmatprep.mubr.bf16.mxu0 0
        %559 = vmatmul.mubr.bf16.gmra.mrb[0].mxu0 %v524
        %v560 = vpop.f32.mrb[0].mxu0
        %v561 = vadd.f32 %v520, %v560
        %v562 = vpop.f32.mrb[0].mxu0
        %v563 = vpop.f32.mrb[0].mxu0
        %v564 = vpop.f32.mrb[0].mxu0
        %565 = vdwg.mxu0
        %v566 = vpack.c.bf16 %v561, %v561
        %v567 = vld [vmem:[%s8] sm:$0x1]
        %v569 = vlaneseq
        %v570 = vshrl.u32 %v569, 7
        %v571 = vsub.s32 0, %v570
        %v572 = vrot.slane %v567, %v571
        %v575 = vsel %vm522, %v494, 0
        %577 = vmatprep.subr.bf16.mxu0 0
        %578 = vmatpush1.bf16.msra.mxu0 %v507
        %579 = vmatprep.subr.bf16.mxu0 0
        %580 = vmatpush1.bf16.msra.mxu0 %v508
        %581 = vmatprep.subr.bf16.mxu0 0
        %582 = vmatpush1.bf16.msra.mxu0 0
        %583 = vmatprep.subr.bf16.mxu0 0
        %584 = vmatpush1.bf16.msra.mxu0 0
        %585 = vmatprep.subr.bf16.mxu0 0
        %586 = vmatpush1.bf16.msra.mxu0 0
        %587 = vmatprep.subr.bf16.mxu0 0
        %588 = vmatpush1.bf16.msra.mxu0 0
        %589 = vmatprep.subr.bf16.mxu0 0
        %590 = vmatpush1.bf16.msra.mxu0 0
        %591 = vmatprep.subr.bf16.mxu0 0
        %592 = vmatpush1.bf16.msra.mxu0 0
        %593 = vmatprep.subr.bf16.mxu0 0
        %594 = vmatpush1.bf16.msra.mxu0 0
        %595 = vmatprep.subr.bf16.mxu0 0
        %596 = vmatpush1.bf16.msra.mxu0 0
        %597 = vmatprep.subr.bf16.mxu0 0
        %598 = vmatpush1.bf16.msra.mxu0 0
        %599 = vmatprep.subr.bf16.mxu0 0
        %600 = vmatpush1.bf16.msra.mxu0 0
        %601 = vmatprep.subr.bf16.mxu0 0
        %602 = vmatpush1.bf16.msra.mxu0 0
        %603 = vmatprep.subr.bf16.mxu0 0
        %604 = vmatpush1.bf16.msra.mxu0 0
        %605 = vmatprep.subr.bf16.mxu0 0
        %606 = vmatpush1.bf16.msra.mxu0 0
        %607 = vmatprep.subr.bf16.mxu0 0
        %608 = vmatpush1.bf16.msra.mxu0 0
        %609 = vmatprep.mubr.bf16.mxu0 0
        %610 = vmatmul.mubr.bf16.gmra.mrb[0].mxu0 %v575
        %v611 = vpop.f32.mrb[0].mxu0
        %v612 = vadd.f32 %v572, %v611
        %v613 = vpop.f32.mrb[0].mxu0
        %v614 = vpop.f32.mrb[0].mxu0
        %v615 = vpop.f32.mrb[0].mxu0
        %616 = vdwg.mxu0
        %v617 = vpack.c.bf16 %v612, %v612
        %v618 = vld [vmem:[%s9] sm:$0x1]
        %v620 = vlaneseq
        %v621 = vshrl.u32 %v620, 7
        %v622 = vsub.s32 0, %v621
        %v623 = vrot.slane %v618, %v622
        %v626 = vsel %vm522, %v496, 0
        %628 = vmatprep.subr.bf16.mxu0 0
        %629 = vmatpush1.bf16.msra.mxu0 %v513
        %630 = vmatprep.subr.bf16.mxu0 0
        %631 = vmatpush1.bf16.msra.mxu0 %v514
        %632 = vmatprep.subr.bf16.mxu0 0
        %633 = vmatpush1.bf16.msra.mxu0 0
        %634 = vmatprep.subr.bf16.mxu0 0
        %635 = vmatpush1.bf16.msra.mxu0 0
        %636 = vmatprep.subr.bf16.mxu0 0
        %637 = vmatpush1.bf16.msra.mxu0 0
        %638 = vmatprep.subr.bf16.mxu0 0
        %639 = vmatpush1.bf16.msra.mxu0 0
        %640 = vmatprep.subr.bf16.mxu0 0
        %641 = vmatpush1.bf16.msra.mxu0 0
        %642 = vmatprep.subr.bf16.mxu0 0
        %643 = vmatpush1.bf16.msra.mxu0 0
        %644 = vmatprep.subr.bf16.mxu0 0
        %645 = vmatpush1.bf16.msra.mxu0 0
        %646 = vmatprep.subr.bf16.mxu0 0
        %647 = vmatpush1.bf16.msra.mxu0 0
        %648 = vmatprep.subr.bf16.mxu0 0
        %649 = vmatpush1.bf16.msra.mxu0 0
        %650 = vmatprep.subr.bf16.mxu0 0
        %651 = vmatpush1.bf16.msra.mxu0 0
        %652 = vmatprep.subr.bf16.mxu0 0
        %653 = vmatpush1.bf16.msra.mxu0 0
        %654 = vmatprep.subr.bf16.mxu0 0
        %655 = vmatpush1.bf16.msra.mxu0 0
        %656 = vmatprep.subr.bf16.mxu0 0
        %657 = vmatpush1.bf16.msra.mxu0 0
        %658 = vmatprep.subr.bf16.mxu0 0
        %659 = vmatpush1.bf16.msra.mxu0 0
        %660 = vmatprep.mubr.bf16.mxu0 0
        %661 = vmatmul.mubr.bf16.gmra.mrb[0].mxu0 %v626
        %v662 = vpop.f32.mrb[0].mxu0
        %v663 = vadd.f32 %v623, %v662
        %v664 = vpop.f32.mrb[0].mxu0
        %v665 = vpop.f32.mrb[0].mxu0
        %v666 = vpop.f32.mrb[0].mxu0
        %667 = vdwg.mxu0
        %v668 = vpack.c.bf16 %v663, %v663
        %v670 = vsel %vm522, %v566, 0
        %v673 = vsel %vm522, %v617, 0
        %675 = vmatprep.subr.bf16.mxu0 0
        %676 = vmatpush1.bf16.xpose.msra.mxu0 %v673
        %677 = vmatprep.subr.bf16.mxu0 0
        %678 = vmatpush1.bf16.xpose.msra.mxu0 0
        %679 = vmatprep.subr.bf16.mxu0 0
        %680 = vmatpush1.bf16.xpose.msra.mxu0 0
        %681 = vmatprep.subr.bf16.mxu0 0
        %682 = vmatpush1.bf16.xpose.msra.mxu0 0
        %683 = vmatprep.subr.bf16.mxu0 0
        %684 = vmatpush1.bf16.xpose.msra.mxu0 0
        %685 = vmatprep.subr.bf16.mxu0 0
        %686 = vmatpush1.bf16.xpose.msra.mxu0 0
        %687 = vmatprep.subr.bf16.mxu0 0
        %688 = vmatpush1.bf16.xpose.msra.mxu0 0
        %689 = vmatprep.subr.bf16.mxu0 0
        %690 = vmatpush1.bf16.xpose.msra.mxu0 0
        %691 = vmatprep.subr.bf16.mxu0 0
        %692 = vmatpush1.bf16.xpose.msra.mxu0 0
        %693 = vmatprep.subr.bf16.mxu0 0
        %694 = vmatpush1.bf16.xpose.msra.mxu0 0
        %695 = vmatprep.subr.bf16.mxu0 0
        %696 = vmatpush1.bf16.xpose.msra.mxu0 0
        %697 = vmatprep.subr.bf16.mxu0 0
        %698 = vmatpush1.bf16.xpose.msra.mxu0 0
        %699 = vmatprep.subr.bf16.mxu0 0
        %700 = vmatpush1.bf16.xpose.msra.mxu0 0
        %701 = vmatprep.subr.bf16.mxu0 0
        %702 = vmatpush1.bf16.xpose.msra.mxu0 0
        %703 = vmatprep.subr.bf16.mxu0 0
        %704 = vmatpush1.bf16.xpose.msra.mxu0 0
        %705 = vmatprep.subr.bf16.mxu0 0
        %706 = vmatpush1.bf16.xpose.msra.mxu0 0
        %707 = vmatprep.mubr.bf16.mxu0 0
        %708 = vmatmul.mubr.bf16.gmra.mrb[0].mxu0 %v670
        %v709 = vpop.f32.mrb[0].mxu0
        %v710 = vadd.f32 0.0, %v709
        %v711 = vpop.f32.mrb[0].mxu0
        %v712 = vpop.f32.mrb[0].mxu0
        %v713 = vpop.f32.mrb[0].mxu0
        %714 = vdwg.mxu0
        %vm715 = vcmask 64512
        %v716 = vsel %vm715, %v710, -inf
        %717 = vmax.xlane.f32.xlu0 %v716
        %v718 = vpop.xlane.xlu0 %717
        %v719 = vsub.f32 %v710, %v718
        %v720 = vmul.f32 %v719, 1.442695
        %v721 = vpow.pop %v720
        %v722 = vsel %vm715, %v721, 0.0
        %723 = vadd.xlane.f32.xlu0 %v722
        %v724 = vpop.xlane.xlu0 %723
        %v725 = vpack.c.bf16 %v721, %v721
        %v727 = vsel %vm715, %v725, 0
        %vm729 = vcmask 1043456
        %v731 = vsel %vm729, %v668, 0
        %733 = vmatprep.subr.bf16.mxu0 0
        %734 = vmatpush1.bf16.msra.mxu0 %v731
        %735 = vmatprep.subr.bf16.mxu0 0
        %736 = vmatpush1.bf16.msra.mxu0 0
        %737 = vmatprep.subr.bf16.mxu0 0
        %738 = vmatpush1.bf16.msra.mxu0 0
        %739 = vmatprep.subr.bf16.mxu0 0
        %740 = vmatpush1.bf16.msra.mxu0 0
        %741 = vmatprep.subr.bf16.mxu0 0
        %742 = vmatpush1.bf16.msra.mxu0 0
        %743 = vmatprep.subr.bf16.mxu0 0
        %744 = vmatpush1.bf16.msra.mxu0 0
        %745 = vmatprep.subr.bf16.mxu0 0
        %746 = vmatpush1.bf16.msra.mxu0 0
        %747 = vmatprep.subr.bf16.mxu0 0
        %748 = vmatpush1.bf16.msra.mxu0 0
        %749 = vmatprep.subr.bf16.mxu0 0
        %750 = vmatpush1.bf16.msra.mxu0 0
        %751 = vmatprep.subr.bf16.mxu0 0
        %752 = vmatpush1.bf16.msra.mxu0 0
        %753 = vmatprep.subr.bf16.mxu0 0
        %754 = vmatpush1.bf16.msra.mxu0 0
        %755 = vmatprep.subr.bf16.mxu0 0
        %756 = vmatpush1.bf16.msra.mxu0 0
        %757 = vmatprep.subr.bf16.mxu0 0
        %758 = vmatpush1.bf16.msra.mxu0 0
        %759 = vmatprep.subr.bf16.mxu0 0
        %760 = vmatpush1.bf16.msra.mxu0 0
        %761 = vmatprep.subr.bf16.mxu0 0
        %762 = vmatpush1.bf16.msra.mxu0 0
        %763 = vmatprep.subr.bf16.mxu0 0
        %764 = vmatpush1.bf16.msra.mxu0 0
        %765 = vmatprep.mubr.bf16.mxu0 0
        %766 = vmatmul.mubr.bf16.gmra.mrb[0].mxu0 %v727
        %v767 = vpop.f32.mrb[0].mxu0
        %v768 = vadd.f32 0.0, %v767
        %v769 = vpop.f32.mrb[0].mxu0
        %v770 = vpop.f32.mrb[0].mxu0
        %v771 = vpop.f32.mrb[0].mxu0
        %772 = vdwg.mxu0
        %v773 = vrcp.pop %v724
        %v774 = vmul.f32 %v768, %v773
        %s775 = scalar_lea.vmem %s3, 32
        %v776 = vld [vmem:[%s775] sm:$0xff]
        %v777 = vld [vmem:[%s775 + $0x8] sm:$0xff]
        %v778 = vld [vmem:[%s775 + $0x10] sm:$0xff]
        %v779 = vld [vmem:[%s775 + $0x18] sm:$0xff]
        %v780 = vpack.c.bf16 %v777, %v776
        %v781 = vpack.c.bf16 %v779, %v778
        %s782 = scalar_lea.vmem [#allocation5], 32
        %v783 = vld [vmem:[%s782] sm:$0xff]
        %v784 = vld [vmem:[%s782 + $0x8] sm:$0xff]
        %v785 = vld [vmem:[%s782 + $0x10] sm:$0xff]
        %v786 = vld [vmem:[%s782 + $0x18] sm:$0xff]
        %v787 = vpack.c.bf16 %v784, %v783
        %v788 = vpack.c.bf16 %v786, %v785
        %s789 = scalar_lea.vmem [#allocation7], 32
        %v790 = vld [vmem:[%s789] sm:$0xff]
        %v791 = vld [vmem:[%s789 + $0x8] sm:$0xff]
        %v792 = vld [vmem:[%s789 + $0x10] sm:$0xff]
        %v793 = vld [vmem:[%s789 + $0x18] sm:$0xff]
        %v794 = vpack.c.bf16 %v791, %v790
        %v795 = vpack.c.bf16 %v793, %v792
        %s796 = scalar_lea.vmem %s7, 1
        %v797 = vld [vmem:[%s796] sm:$0x1]
        %v799 = vlaneseq
        %v800 = vshrl.u32 %v799, 7
        %v801 = vsub.s32 0, %v800
        %v802 = vrot.slane %v797, %v801
        %804 = vmatprep.subr.bf16.mxu0 0
        %805 = vmatpush1.bf16.msra.mxu0 %v780
        %806 = vmatprep.subr.bf16.mxu0 0
        %807 = vmatpush1.bf16.msra.mxu0 %v781
        %808 = vmatprep.subr.bf16.mxu0 0
        %809 = vmatpush1.bf16.msra.mxu0 0
        %810 = vmatprep.subr.bf16.mxu0 0
        %811 = vmatpush1.bf16.msra.mxu0 0
        %812 = vmatprep.subr.bf16.mxu0 0
        %813 = vmatpush1.bf16.msra.mxu0 0
        %814 = vmatprep.subr.bf16.mxu0 0
        %815 = vmatpush1.bf16.msra.mxu0 0
        %816 = vmatprep.subr.bf16.mxu0 0
        %817 = vmatpush1.bf16.msra.mxu0 0
        %818 = vmatprep.subr.bf16.mxu0 0
        %819 = vmatpush1.bf16.msra.mxu0 0
        %820 = vmatprep.subr.bf16.mxu0 0
        %821 = vmatpush1.bf16.msra.mxu0 0
        %822 = vmatprep.subr.bf16.mxu0 0
        %823 = vmatpush1.bf16.msra.mxu0 0
        %824 = vmatprep.subr.bf16.mxu0 0
        %825 = vmatpush1.bf16.msra.mxu0 0
        %826 = vmatprep.subr.bf16.mxu0 0
        %827 = vmatpush1.bf16.msra.mxu0 0
        %828 = vmatprep.subr.bf16.mxu0 0
        %829 = vmatpush1.bf16.msra.mxu0 0
        %830 = vmatprep.subr.bf16.mxu0 0
        %831 = vmatpush1.bf16.msra.mxu0 0
        %832 = vmatprep.subr.bf16.mxu0 0
        %833 = vmatpush1.bf16.msra.mxu0 0
        %834 = vmatprep.subr.bf16.mxu0 0
        %835 = vmatpush1.bf16.msra.mxu0 0
        %836 = vmatprep.mubr.bf16.mxu0 0
        %837 = vmatmul.mubr.bf16.gmra.mrb[0].mxu0 %v524
        %v838 = vpop.f32.mrb[0].mxu0
        %v839 = vadd.f32 %v802, %v838
        %v840 = vpop.f32.mrb[0].mxu0
        %v841 = vpop.f32.mrb[0].mxu0
        %v842 = vpop.f32.mrb[0].mxu0
        %843 = vdwg.mxu0
        %v844 = vpack.c.bf16 %v839, %v839
        %s845 = scalar_lea.vmem %s8, 1
        %v846 = vld [vmem:[%s845] sm:$0x1]
        %v848 = vlaneseq
        %v849 = vshrl.u32 %v848, 7
        %v850 = vsub.s32 0, %v849
        %v851 = vrot.slane %v846, %v850
        %853 = vmatprep.subr.bf16.mxu0 0
        %854 = vmatpush1.bf16.msra.mxu0 %v787
        %855 = vmatprep.subr.bf16.mxu0 0
        %856 = vmatpush1.bf16.msra.mxu0 %v788
        %857 = vmatprep.subr.bf16.mxu0 0
        %858 = vmatpush1.bf16.msra.mxu0 0
        %859 = vmatprep.subr.bf16.mxu0 0
        %860 = vmatpush1.bf16.msra.mxu0 0
        %861 = vmatprep.subr.bf16.mxu0 0
        %862 = vmatpush1.bf16.msra.mxu0 0
        %863 = vmatprep.subr.bf16.mxu0 0
        %864 = vmatpush1.bf16.msra.mxu0 0
        %865 = vmatprep.subr.bf16.mxu0 0
        %866 = vmatpush1.bf16.msra.mxu0 0
        %867 = vmatprep.subr.bf16.mxu0 0
        %868 = vmatpush1.bf16.msra.mxu0 0
        %869 = vmatprep.subr.bf16.mxu0 0
        %870 = vmatpush1.bf16.msra.mxu0 0
        %871 = vmatprep.subr.bf16.mxu0 0
        %872 = vmatpush1.bf16.msra.mxu0 0
        %873 = vmatprep.subr.bf16.mxu0 0
        %874 = vmatpush1.bf16.msra.mxu0 0
        %875 = vmatprep.subr.bf16.mxu0 0
        %876 = vmatpush1.bf16.msra.mxu0 0
        %877 = vmatprep.subr.bf16.mxu0 0
        %878 = vmatpush1.bf16.msra.mxu0 0
        %879 = vmatprep.subr.bf16.mxu0 0
        %880 = vmatpush1.bf16.msra.mxu0 0
        %881 = vmatprep.subr.bf16.mxu0 0
        %882 = vmatpush1.bf16.msra.mxu0 0
        %883 = vmatprep.subr.bf16.mxu0 0
        %884 = vmatpush1.bf16.msra.mxu0 0
        %885 = vmatprep.mubr.bf16.mxu0 0
        %886 = vmatmul.mubr.bf16.gmra.mrb[0].mxu0 %v575
        %v887 = vpop.f32.mrb[0].mxu0
        %v888 = vadd.f32 %v851, %v887
        %v889 = vpop.f32.mrb[0].mxu0
        %v890 = vpop.f32.mrb[0].mxu0
        %v891 = vpop.f32.mrb[0].mxu0
        %892 = vdwg.mxu0
        %v893 = vpack.c.bf16 %v888, %v888
        %s894 = scalar_lea.vmem %s9, 1
        %v895 = vld [vmem:[%s894] sm:$0x1]
        %v897 = vlaneseq
        %v898 = vshrl.u32 %v897, 7
        %v899 = vsub.s32 0, %v898
        %v900 = vrot.slane %v895, %v899
        %902 = vmatprep.subr.bf16.mxu0 0
        %903 = vmatpush1.bf16.msra.mxu0 %v794
        %904 = vmatprep.subr.bf16.mxu0 0
        %905 = vmatpush1.bf16.msra.mxu0 %v795
        %906 = vmatprep.subr.bf16.mxu0 0
        %907 = vmatpush1.bf16.msra.mxu0 0
        %908 = vmatprep.subr.bf16.mxu0 0
        %909 = vmatpush1.bf16.msra.mxu0 0
        %910 = vmatprep.subr.bf16.mxu0 0
        %911 = vmatpush1.bf16.msra.mxu0 0
        %912 = vmatprep.subr.bf16.mxu0 0
        %913 = vmatpush1.bf16.msra.mxu0 0
        %914 = vmatprep.subr.bf16.mxu0 0
        %915 = vmatpush1.bf16.msra.mxu0 0
        %916 = vmatprep.subr.bf16.mxu0 0
        %917 = vmatpush1.bf16.msra.mxu0 0
        %918 = vmatprep.subr.bf16.mxu0 0
        %919 = vmatpush1.bf16.msra.mxu0 0
        %920 = vmatprep.subr.bf16.mxu0 0
        %921 = vmatpush1.bf16.msra.mxu0 0
        %922 = vmatprep.subr.bf16.mxu0 0
        %923 = vmatpush1.bf16.msra.mxu0 0
        %924 = vmatprep.subr.bf16.mxu0 0
        %925 = vmatpush1.bf16.msra.mxu0 0
        %926 = vmatprep.subr.bf16.mxu0 0
        %927 = vmatpush1.bf16.msra.mxu0 0
        %928 = vmatprep.subr.bf16.mxu0 0
        %929 = vmatpush1.bf16.msra.mxu0 0
        %930 = vmatprep.subr.bf16.mxu0 0
        %931 = vmatpush1.bf16.msra.mxu0 0
        %932 = vmatprep.subr.bf16.mxu0 0
        %933 = vmatpush1.bf16.msra.mxu0 0
        %934 = vmatprep.mubr.bf16.mxu0 0
        %935 = vmatmul.mubr.bf16.gmra.mrb[0].mxu0 %v626
        %v936 = vpop.f32.mrb[0].mxu0
        %v937 = vadd.f32 %v900, %v936
        %v938 = vpop.f32.mrb[0].mxu0
        %v939 = vpop.f32.mrb[0].mxu0
        %v940 = vpop.f32.mrb[0].mxu0
        %941 = vdwg.mxu0
        %v942 = vpack.c.bf16 %v937, %v937
        %v944 = vsel %vm522, %v844, 0
        %v947 = vsel %vm522, %v893, 0
        %949 = vmatprep.subr.bf16.mxu0 0
        %950 = vmatpush1.bf16.xpose.msra.mxu0 %v947
        %951 = vmatprep.subr.bf16.mxu0 0
        %952 = vmatpush1.bf16.xpose.msra.mxu0 0
        %953 = vmatprep.subr.bf16.mxu0 0
        %954 = vmatpush1.bf16.xpose.msra.mxu0 0
        %955 = vmatprep.subr.bf16.mxu0 0
        %956 = vmatpush1.bf16.xpose.msra.mxu0 0
        %957 = vmatprep.subr.bf16.mxu0 0
        %958 = vmatpush1.bf16.xpose.msra.mxu0 0
        %959 = vmatprep.subr.bf16.mxu0 0
        %960 = vmatpush1.bf16.xpose.msra.mxu0 0
        %961 = vmatprep.subr.bf16.mxu0 0
        %962 = vmatpush1.bf16.xpose.msra.mxu0 0
        %963 = vmatprep.subr.bf16.mxu0 0
        %964 = vmatpush1.bf16.xpose.msra.mxu0 0
        %965 = vmatprep.subr.bf16.mxu0 0
        %966 = vmatpush1.bf16.xpose.msra.mxu0 0
        %967 = vmatprep.subr.bf16.mxu0 0
        %968 = vmatpush1.bf16.xpose.msra.mxu0 0
        %969 = vmatprep.subr.bf16.mxu0 0
        %970 = vmatpush1.bf16.xpose.msra.mxu0 0
        %971 = vmatprep.subr.bf16.mxu0 0
        %972 = vmatpush1.bf16.xpose.msra.mxu0 0
        %973 = vmatprep.subr.bf16.mxu0 0
        %974 = vmatpush1.bf16.xpose.msra.mxu0 0
        %975 = vmatprep.subr.bf16.mxu0 0
        %976 = vmatpush1.bf16.xpose.msra.mxu0 0
        %977 = vmatprep.subr.bf16.mxu0 0
        %978 = vmatpush1.bf16.xpose.msra.mxu0 0
        %979 = vmatprep.subr.bf16.mxu0 0
        %980 = vmatpush1.bf16.xpose.msra.mxu0 0
        %981 = vmatprep.mubr.bf16.mxu0 0
        %982 = vmatmul.mubr.bf16.gmra.mrb[0].mxu0 %v944
        %v983 = vpop.f32.mrb[0].mxu0
        %v984 = vadd.f32 0.0, %v983
        %v985 = vpop.f32.mrb[0].mxu0
        %v986 = vpop.f32.mrb[0].mxu0
        %v987 = vpop.f32.mrb[0].mxu0
        %988 = vdwg.mxu0
        %v989 = vsel %vm715, %v984, -inf
        %990 = vmax.xlane.f32.xlu0 %v989
        %v991 = vpop.xlane.xlu0 %990
        %v992 = vsub.f32 %v984, %v991
        %v993 = vmul.f32 %v992, 1.442695
        %v994 = vpow.pop %v993
        %v995 = vsel %vm715, %v994, 0.0
        %996 = vadd.xlane.f32.xlu0 %v995
        %v997 = vpop.xlane.xlu0 %996
        %v998 = vpack.c.bf16 %v994, %v994
        %v1000 = vsel %vm715, %v998, 0
        %v1003 = vsel %vm729, %v942, 0
        %1005 = vmatprep.subr.bf16.mxu0 0
        %1006 = vmatpush1.bf16.msra.mxu0 %v1003
        %1007 = vmatprep.subr.bf16.mxu0 0
        %1008 = vmatpush1.bf16.msra.mxu0 0
        %1009 = vmatprep.subr.bf16.mxu0 0
        %1010 = vmatpush1.bf16.msra.mxu0 0
        %1011 = vmatprep.subr.bf16.mxu0 0
        %1012 = vmatpush1.bf16.msra.mxu0 0
        %1013 = vmatprep.subr.bf16.mxu0 0
        %1014 = vmatpush1.bf16.msra.mxu0 0
        %1015 = vmatprep.subr.bf16.mxu0 0
        %1016 = vmatpush1.bf16.msra.mxu0 0
        %1017 = vmatprep.subr.bf16.mxu0 0
        %1018 = vmatpush1.bf16.msra.mxu0 0
        %1019 = vmatprep.subr.bf16.mxu0 0
        %1020 = vmatpush1.bf16.msra.mxu0 0
        %1021 = vmatprep.subr.bf16.mxu0 0
        %1022 = vmatpush1.bf16.msra.mxu0 0
        %1023 = vmatprep.subr.bf16.mxu0 0
        %1024 = vmatpush1.bf16.msra.mxu0 0
        %1025 = vmatprep.subr.bf16.mxu0 0
        %1026 = vmatpush1.bf16.msra.mxu0 0
        %1027 = vmatprep.subr.bf16.mxu0 0
        %1028 = vmatpush1.bf16.msra.mxu0 0
        %1029 = vmatprep.subr.bf16.mxu0 0
        %1030 = vmatpush1.bf16.msra.mxu0 0
        %1031 = vmatprep.subr.bf16.mxu0 0
        %1032 = vmatpush1.bf16.msra.mxu0 0
        %1033 = vmatprep.subr.bf16.mxu0 0
        %1034 = vmatpush1.bf16.msra.mxu0 0
        %1035 = vmatprep.subr.bf16.mxu0 0
        %1036 = vmatpush1.bf16.msra.mxu0 0
        %1037 = vmatprep.mubr.bf16.mxu0 0
        %1038 = vmatmul.mubr.bf16.gmra.mrb[0].mxu0 %v1000
        %v1039 = vpop.f32.mrb[0].mxu0
        %v1040 = vadd.f32 0.0, %v1039
        %v1041 = vpop.f32.mrb[0].mxu0
        %v1042 = vpop.f32.mrb[0].mxu0
        %v1043 = vpop.f32.mrb[0].mxu0
        %1044 = vdwg.mxu0
        %v1045 = vrcp.pop %v997
        %v1046 = vmul.f32 %v1040, %v1045
        %1048 = vrot.lane.b32.xlu0 %v1046, 32
        %v1049 = vpop.permute.xlu0 %1048
        %v1051 = vsel %vm522, %v774, %v1049
        %v1052 = vpack.c.bf16 %v1051, %v1051
        %v1053 = vld [vmem:[%s6] sm:$0xff]
        %v1054 = vld [vmem:[%s6 + $0x8] sm:$0xff]
        %v1055 = vld [vmem:[%s6 + $0x10] sm:$0xff]
        %v1056 = vld [vmem:[%s6 + $0x18] sm:$0xff]
        %v1057 = vld [vmem:[%s6 + $0x20] sm:$0xff]
        %v1058 = vld [vmem:[%s6 + $0x28] sm:$0xff]
        %v1059 = vld [vmem:[%s6 + $0x30] sm:$0xff]
        %v1060 = vld [vmem:[%s6 + $0x38] sm:$0xff]
        %v1061 = vpack.c.bf16 %v1054, %v1053
        %v1062 = vpack.c.bf16 %v1056, %v1055
        %v1063 = vpack.c.bf16 %v1058, %v1057
        %v1064 = vpack.c.bf16 %v1060, %v1059
        %v1065 = vld [vmem:[%s10] sm:$0x1]
        %v1067 = vlaneseq
        %v1068 = vshrl.u32 %v1067, 7
        %v1069 = vsub.s32 0, %v1068
        %v1070 = vrot.slane %v1065, %v1069
        %vm1072 = vcmask 523264
        %v1074 = vsel %vm1072, %v1052, 0
        %1076 = vmatprep.subr.bf16.mxu0 0
        %1077 = vmatpush1.bf16.msra.mxu0 %v1061
        %1078 = vmatprep.subr.bf16.mxu0 0
        %1079 = vmatpush1.bf16.msra.mxu0 %v1062
        %1080 = vmatprep.subr.bf16.mxu0 0
        %1081 = vmatpush1.bf16.msra.mxu0 %v1063
        %1082 = vmatprep.subr.bf16.mxu0 0
        %1083 = vmatpush1.bf16.msra.mxu0 %v1064
        %1084 = vmatprep.subr.bf16.mxu0 0
        %1085 = vmatpush1.bf16.msra.mxu0 0
        %1086 = vmatprep.subr.bf16.mxu0 0
        %1087 = vmatpush1.bf16.msra.mxu0 0
        %1088 = vmatprep.subr.bf16.mxu0 0
        %1089 = vmatpush1.bf16.msra.mxu0 0
        %1090 = vmatprep.subr.bf16.mxu0 0
        %1091 = vmatpush1.bf16.msra.mxu0 0
        %1092 = vmatprep.subr.bf16.mxu0 0
        %1093 = vmatpush1.bf16.msra.mxu0 0
        %1094 = vmatprep.subr.bf16.mxu0 0
        %1095 = vmatpush1.bf16.msra.mxu0 0
        %1096 = vmatprep.subr.bf16.mxu0 0
        %1097 = vmatpush1.bf16.msra.mxu0 0
        %1098 = vmatprep.subr.bf16.mxu0 0
        %1099 = vmatpush1.bf16.msra.mxu0 0
        %1100 = vmatprep.subr.bf16.mxu0 0
        %1101 = vmatpush1.bf16.msra.mxu0 0
        %1102 = vmatprep.subr.bf16.mxu0 0
        %1103 = vmatpush1.bf16.msra.mxu0 0
        %1104 = vmatprep.subr.bf16.mxu0 0
        %1105 = vmatpush1.bf16.msra.mxu0 0
        %1106 = vmatprep.subr.bf16.mxu0 0
        %1107 = vmatpush1.bf16.msra.mxu0 0
        %1108 = vmatprep.mubr.bf16.mxu0 0
        %1109 = vmatmul.mubr.bf16.gmra.mrb[0].mxu0 %v1074
        %v1110 = vpop.f32.mrb[0].mxu0
        %v1111 = vadd.f32 %v1070, %v1110
        %v1112 = vpop.f32.mrb[0].mxu0
        %v1113 = vpop.f32.mrb[0].mxu0
        %v1114 = vpop.f32.mrb[0].mxu0
        %1115 = vdwg.mxu0
        %1116 = vst.msk [vmem:[%s478] sm:$0xff] %vm522, %v1111
        %s1117 = sand.u32 %s299, 1
        %s1118 = scalar_lea.sflag [#allocation4], %s1117
        %s1119 = sand.u32 %s299, 1
        %s1120 = smul.addr %s1119, 8
        %s1121 = scalar_lea.vmem [#allocation8], %s1120
        // Predicated region
        $region77: #{tpu_custom_call.1} parent=63 // pred_check
          %p1122 = pneg %p309
        $region78: #{tpu_custom_call.1} parent=63 // pred_check_branch
          %1124 = sbr.rel (%p1122) target = $region80
        $region79: #{tpu_custom_call.1} parent=63 // pred_region
          %s1126 = ssub.s32 128, 128
          %1127 = vsyncadd %s1118, %s1126
          %s1128 = sadd.s32 %s34, %s33
          %s1129 = smul.addr %s1128, 128
          %s1130 = scalar_lea.hbm %s11, %s1129
          %s1132 = sshll.u32 %s1121, 4
          %s1133 = int_to_ptr.vmem [resolvable:$true] %s1132
          %1135 = dma.vmem_to_hbm [thread:$0]  %s1133, 128, %s1130, %s1118
        $region80: #{tpu_custom_call.1} parent=63 // pred_fallthru
          _
      $region64: #{tpu_custom_call.1} parent=5 // pred_fallthru
        _
      %p1136 = scmp.le.s32.totalorder 2, %s24
      // Predicated region
      $region81: #{tpu_custom_call.1} parent=5 // pred_check
        %p1137 = pneg %p1136
      $region82: #{tpu_custom_call.1} parent=5 // pred_check_branch
        %1139 = sbr.rel (%p1137) target = $region84
      $region83: #{tpu_custom_call.1} parent=5 // pred_region
        %s1140 = ssub.s32 %s24, 2
        // Predicated region
        $region85: #{tpu_custom_call.1} parent=83 // pred_check
          %p1141 = pneg %p315
        $region86: #{tpu_custom_call.1} parent=83 // pred_check_branch
          %1143 = sbr.rel (%p1141) target = $region88
        $region87: #{tpu_custom_call.1} parent=83 // pred_region
          %s1144 = sand.u32 %s300, 1
          %s1145 = scalar_lea.sflag [#allocation4], %s1144
          %s1146 = sand.u32 %s300, 1
          %s1147 = smul.addr %s1146, 8
          %s1148 = scalar_lea.vmem [#allocation8], %s1147
          %1149 = dma.done %s1145, 128
        $region88: #{tpu_custom_call.1} parent=83 // pred_fallthru
          _
      $region84: #{tpu_custom_call.1} parent=5 // pred_fallthru
        _
    $region6: #{tpu_custom_call.1} parent=1 // loop_footer
      %s28 = sadd.s32 1, %s24
    $region7: #{tpu_custom_call.1} parent=1 // loop_footer_branch
      %23 = sbr.rel target = $region3
    $region8: #{tpu_custom_call.1} parent=1 // loop_exit
      _
    %1150 = vsyncpa [#allocation3], 1
    %s1151 = scalar_lea.sflag [#allocation3], 1
    %1152 = vsyncpa %s1151, 1
    %1153 = vsyncpa [#allocation6], 1
    %1154 = vsyncpa [#allocation4], 1
    %s1155 = scalar_lea.sflag [#allocation4], 1
    %1156 = vsyncpa %s1155, 1

</llo_original>
